<compile_context>
chip_gen: v5e
topology: v5e:2x2
jax: 0.10.0
libtpu: 0.0.40
codegen_flags: <defaults>
</compile_context>

<pallas_src>
import jax
import jax.numpy as jnp
from jax.experimental import pallas as pl
from jax.experimental.pallas import tpu as pltpu


# ----------------------------- Pallas kernel ------------------------------ #

def _rnn_step_kernel(ids_ref,            # SMEM (B,) int32 token ids
                     h_ref, c_ref,       # VMEM (L, B, H) f32 state (aliased outs)
                     w0g_ref,            # VMEM (V, 4H) f32  fused emb @ W_ih0
                     w_hh0_ref,          # VMEM (H, 4H) bf16 layer-0 recurrent
                     w_deep_ref,         # VMEM (L-1, 2H, 4H) bf16 fused [W_ih;W_hh]
                     b_ref,              # VMEM (L, 1, 4H) f32  b_ih + b_hh
                     fc_w_ref,           # VMEM (H, O) bf16
                     fc_b_ref,           # VMEM (1, O) f32
                     out_ref,            # VMEM (B, O) f32
                     h_out_ref,          # VMEM (L, B, H) f32  (aliases h input)
                     c_out_ref,          # VMEM (L, B, H) f32  (aliases c input)
                     g0_scratch):        # VMEM (B, 4H) f32
    L, B, H = h_ref.shape

    # ---- Embedding folded into layer 0: gather precomputed gate rows by id ----
    for b in range(B):                                     # B static & small
        g0_scratch[pl.ds(b, 1), :] = w0g_ref[pl.ds(ids_ref[b], 1), :]
    gates_x0 = g0_scratch[...]                             # (B, 4H) f32

    def lstm_cell(gates, c_prev):
        # gate order i, f, g, o (torch.nn.LSTM); slices are lane-aligned (H=128)
        i_g = jax.nn.sigmoid(gates[:, 0 * H:1 * H])
        f_g = jax.nn.sigmoid(gates[:, 1 * H:2 * H])
        g_g = jnp.tanh(gates[:, 2 * H:3 * H])
        o_g = jax.nn.sigmoid(gates[:, 3 * H:4 * H])
        c_new = f_g * c_prev + i_g * g_g
        h_new = o_g * jnp.tanh(c_new)
        return h_new, c_new

    # ---- Layer 0: gates = gather(emb@W_ih0) + h0 @ W_hh0 + b0 ----
    gates0 = (gates_x0
              + jnp.dot(h_ref[0].astype(w_hh0_ref.dtype), w_hh0_ref[...],
                        preferred_element_type=jnp.float32)
              + b_ref[0])
    h_new, c_new = lstm_cell(gates0, c_ref[0])
    h_out_ref[0] = h_new
    c_out_ref[0] = c_new

    # ---- Deep layers: single fused matmul [x ; h] @ [W_ih ; W_hh] ----
    inp = h_new
    for l in range(1, L):                                  # static, small (L=2)
        xh = jnp.concatenate([inp, h_ref[l]], axis=1).astype(w_deep_ref.dtype)
        gates = (jnp.dot(xh, w_deep_ref[l - 1],
                         preferred_element_type=jnp.float32)
                 + b_ref[l])
        h_new, c_new = lstm_cell(gates, c_ref[l])
        h_out_ref[l] = h_new
        c_out_ref[l] = c_new
        inp = h_new

    # ---- FC head: (B, H) @ (H, O) + (1, O) ----
    out_ref[...] = (jnp.dot(inp.astype(fc_w_ref.dtype), fc_w_ref[...],
                            preferred_element_type=jnp.float32)
                    + fc_b_ref[...])


# ------------------------------ JAX wrapper -------------------------------- #

@jax.jit
def rnn_forward(fused, x, hidden, cell):
    """Equivalent of RNN.forward(x, hidden, cell) for one step."""
    L, B, H = hidden.shape
    O = fused["fc_w"].shape[1]

    vmem = pl.BlockSpec(memory_space=pltpu.MemorySpace.VMEM)
    smem = pl.BlockSpec(memory_space=pltpu.MemorySpace.SMEM)

    out, h_new, c_new = pl.pallas_call(
        _rnn_step_kernel,
        out_shape=(
            jax.ShapeDtypeStruct((B, O), jnp.float32),
            jax.ShapeDtypeStruct((L, B, H), jnp.float32),
            jax.ShapeDtypeStruct((L, B, H), jnp.float32),
        ),
        in_specs=[smem, vmem, vmem, vmem, vmem, vmem, vmem, vmem, vmem],
        out_specs=(vmem, vmem, vmem),
        scratch_shapes=[pltpu.VMEM((B, 4 * H), jnp.float32)],
        # hidden -> h_out, cell -> c_out updated in place (donate at the jit
        # boundary in a real generation loop to avoid the defensive copy).
        input_output_aliases={1: 1, 2: 2},
    )(x.astype(jnp.int32), hidden, cell,
      fused["w0_gates"], fused["w_hh0"], fused["w_deep"], fused["b"],
      fused["fc_w"], fused["fc_b"])

    return out, (h_new, c_new)


# --------------------------- pure-JAX reference ---------------------------- #

def rnn_forward_ref(fused, x, hidden, cell):
    """Mirrors the fused math (identical bf16 weight quantization) in plain JAX."""
    L, B, H = hidden.shape

    def lstm_cell(gates, c_prev):
        i_g = jax.nn.sigmoid(gates[:, 0 * H:1 * H])
        f_g = jax.nn.sigmoid(gates[:, 1 * H:2 * H])
        g_g = jnp.tanh(gates[:, 2 * H:3 * H])
        o_g = jax.nn.sigmoid(gates[:, 3 * H:4 * H])
        c_new = f_g * c_prev + i_g * g_g
        return o_g * jnp.tanh(c_new), c_new

    gates0 = (fused["w0_gates"][x]
              + jnp.dot(hidden[0].astype(fused["w_hh0"].dtype), fused["w_hh0"],
                        preferred_element_type=jnp.float32)
              + fused["b"][0])
    h_new, c_new = lstm_cell(gates0, cell[0])
    h_out, c_out = [h_new], [c_new]

    inp = h_new
    for l in range(1, L):
        xh = jnp.concatenate([inp, hidden[l]], axis=1).astype(fused["w_deep"].dtype)
        gates = (jnp.dot(xh, fused["w_deep"][l - 1],
                         preferred_element_type=jnp.float32)
                 + fused["b"][l])
        h_new, c_new = lstm_cell(gates, cell[l])
        h_out.append(h_new)
        c_out.append(c_new)
        inp = h_new

    out = (jnp.dot(inp.astype(fused["fc_w"].dtype), fused["fc_w"],
                   preferred_element_type=jnp.float32)
           + fused["fc_b"])
    return out, (jnp.stack(h_out), jnp.stack(c_out))


# ----------------------------- param init ---------------------------------- #

def init_params(key, input_size, hidden_size, num_layers, output_size):
    """PyTorch-equivalent parameters, pre-transposed to row-major matmul layout."""
    V, H, L, O = input_size, hidden_size, num_layers, output_size
    ks = jax.random.split(key, 8)
    bound = 1.0 / jnp.sqrt(H)
    u = lambda k, shape: jax.random.uniform(k, shape, jnp.float32, -bound, bound)
    return {
        "emb_w": jax.random.normal(ks[0], (V, H), jnp.float32),
        # PyTorch weight_ih_l{k}/weight_hh_l{k} are (4H, H); stored as (H, 4H)
        "w_ih": u(ks[1], (L, H, 4 * H)),
        "w_hh": u(ks[2], (L, H, 4 * H)),
        "b_ih": u(ks[3], (L, 1, 4 * H)),
        "b_hh": u(ks[4], (L, 1, 4 * H)),
        # PyTorch fc.weight is (O, H); stored as (H, O)
        "fc_w": u(ks[5], (H, O)),
        "fc_b": u(ks[6], (1, O)),
    }


def fuse_params(params, compute_dtype=jnp.bfloat16):
    """One-time weight folding: embedding into layer-0 gates, [W_ih;W_hh] merge,
    bias pre-add, bf16 matmul weights (pass jnp.float32 for exact f32 semantics)."""
    emb_w, w_ih, w_hh = params["emb_w"], params["w_ih"], params["w_hh"]
    L, H = w_ih.shape[0], emb_w.shape[1]

    # (V, 4H): row `v` is emb_w[v] @ W_ih0  -> embedding gather == gate-row gather.
    w0_gates = jnp.dot(emb_w, w_ih[0], preferred_element_type=jnp.float32)

    if L > 1:
        w_deep = jnp.stack([jnp.concatenate([w_ih[l], w_hh[l]], axis=0)
                            for l in range(1, L)]).astype(compute_dtype)
    else:  # placeholder, never indexed when L == 1
        w_deep = jnp.zeros((1, 2 * H, 4 * H), compute_dtype)

    return {
        "w0_gates": w0_gates,                               # f32 (gathered by id)
        "w_hh0": w_hh[0].astype(compute_dtype),             # (H, 4H)
        "w_deep": w_deep,                                   # (L-1, 2H, 4H)
        "b": params["b_ih"] + params["b_hh"],               # (L, 1, 4H) f32
        "fc_w": params["fc_w"].astype(compute_dtype),       # (H, O)
        "fc_b": params["fc_b"],                             # (1, O) f32
    }


# --------------------------------- main ------------------------------------ #

if __name__ == "__main__":
    # Small but TPU-tile-aligned shapes: everything lands on (8, 128) tiles.
    input_size = 128     # vocab size
    hidden_size = 128
    num_layers = 2
    output_size = 128
    batch = 8

    key = jax.random.PRNGKey(0)
    k_par, k_x, k_h, k_c = jax.random.split(key, 4)

    params = init_params(k_par, input_size, hidden_size, num_layers, output_size)
    fused = fuse_params(params)

    x = jax.random.randint(k_x, (batch,), 0, input_size, dtype=jnp.int32)
    hidden = jax.random.normal(k_h, (num_layers, batch, hidden_size), jnp.float32)
    cell = jax.random.normal(k_c, (num_layers, batch, hidden_size), jnp.float32)

    out, (h_new, c_new) = rnn_forward(fused, x, hidden, cell)
    jax.block_until_ready((out, h_new, c_new))

    out_r, (h_r, c_r) = rnn_forward_ref(fused, x, hidden, cell)
    assert jnp.allclose(out, out_r, atol=1e-3, rtol=1e-3)
    assert jnp.allclose(h_new, h_r, atol=1e-3, rtol=1e-3)
    assert jnp.allclose(c_new, c_r, atol=1e-3, rtol=1e-3)

    print("KERNEL_OK")
</pallas_src>

<mosaic_0001>
module attributes {stable_mosaic.version = 11 : i64} {
  func.func @_rnn_step_kernel(%arg0: memref<8xi32, #tpu.memory_space<smem>>, %arg1: memref<2x8x128xf32, #tpu.memory_space<vmem>>, %arg2: memref<2x8x128xf32, #tpu.memory_space<vmem>>, %arg3: memref<128x512xf32, #tpu.memory_space<vmem>>, %arg4: memref<128x512xbf16, #tpu.memory_space<vmem>>, %arg5: memref<1x256x512xbf16, #tpu.memory_space<vmem>>, %arg6: memref<2x1x512xf32, #tpu.memory_space<vmem>>, %arg7: memref<128x128xbf16, #tpu.memory_space<vmem>>, %arg8: memref<1x128xf32, #tpu.memory_space<vmem>>, %arg9: memref<8x128xf32, #tpu.memory_space<vmem>>, %arg10: memref<2x8x128xf32, #tpu.memory_space<vmem>>, %arg11: memref<2x8x128xf32, #tpu.memory_space<vmem>>, %arg12: memref<8x512xf32, #tpu.memory_space<vmem>>) attributes {dimension_semantics = [], scalar_prefetch = 0 : i64, scratch_operands = 1 : i64, tpu.core_type = #tpu.core_type<tc>} {
    %c0 = arith.constant 0 : index
    %0 = memref.load %arg0[%c0] : memref<8xi32, #tpu.memory_space<smem>>
    %1 = arith.index_cast %0 : i32 to index
    %c0_0 = arith.constant 0 : index
    %2 = vector.load %arg3[%1, %c0_0] : memref<128x512xf32, #tpu.memory_space<vmem>>, vector<1x512xf32>
    %c0_1 = arith.constant 0 : index
    %c0_2 = arith.constant 0 : index
    %3 = vector.load %arg12[%c0_1, %c0_2] : memref<8x512xf32, #tpu.memory_space<vmem>>, vector<1x512xf32>
    tpu.vector_store %arg12[%c0_1, %c0_2], %2 {strides = array<i32>} : memref<8x512xf32, #tpu.memory_space<vmem>>, vector<1x512xf32>,
    %c1 = arith.constant 1 : index
    %4 = memref.load %arg0[%c1] : memref<8xi32, #tpu.memory_space<smem>>
    %5 = arith.index_cast %4 : i32 to index
    %c0_3 = arith.constant 0 : index
    %6 = vector.load %arg3[%5, %c0_3] : memref<128x512xf32, #tpu.memory_space<vmem>>, vector<1x512xf32>
    %c1_4 = arith.constant 1 : index
    %c0_5 = arith.constant 0 : index
    %7 = vector.load %arg12[%c1_4, %c0_5] : memref<8x512xf32, #tpu.memory_space<vmem>>, vector<1x512xf32>
    tpu.vector_store %arg12[%c1_4, %c0_5], %6 {strides = array<i32>} : memref<8x512xf32, #tpu.memory_space<vmem>>, vector<1x512xf32>,
    %c2 = arith.constant 2 : index
    %8 = memref.load %arg0[%c2] : memref<8xi32, #tpu.memory_space<smem>>
    %9 = arith.index_cast %8 : i32 to index
    %c0_6 = arith.constant 0 : index
    %10 = vector.load %arg3[%9, %c0_6] : memref<128x512xf32, #tpu.memory_space<vmem>>, vector<1x512xf32>
    %c2_7 = arith.constant 2 : index
    %c0_8 = arith.constant 0 : index
    %11 = vector.load %arg12[%c2_7, %c0_8] : memref<8x512xf32, #tpu.memory_space<vmem>>, vector<1x512xf32>
    tpu.vector_store %arg12[%c2_7, %c0_8], %10 {strides = array<i32>} : memref<8x512xf32, #tpu.memory_space<vmem>>, vector<1x512xf32>,
    %c3 = arith.constant 3 : index
    %12 = memref.load %arg0[%c3] : memref<8xi32, #tpu.memory_space<smem>>
    %13 = arith.index_cast %12 : i32 to index
    %c0_9 = arith.constant 0 : index
    %14 = vector.load %arg3[%13, %c0_9] : memref<128x512xf32, #tpu.memory_space<vmem>>, vector<1x512xf32>
    %c3_10 = arith.constant 3 : index
    %c0_11 = arith.constant 0 : index
    %15 = vector.load %arg12[%c3_10, %c0_11] : memref<8x512xf32, #tpu.memory_space<vmem>>, vector<1x512xf32>
    tpu.vector_store %arg12[%c3_10, %c0_11], %14 {strides = array<i32>} : memref<8x512xf32, #tpu.memory_space<vmem>>, vector<1x512xf32>,
    %c4 = arith.constant 4 : index
    %16 = memref.load %arg0[%c4] : memref<8xi32, #tpu.memory_space<smem>>
    %17 = arith.index_cast %16 : i32 to index
    %c0_12 = arith.constant 0 : index
    %18 = vector.load %arg3[%17, %c0_12] : memref<128x512xf32, #tpu.memory_space<vmem>>, vector<1x512xf32>
    %c4_13 = arith.constant 4 : index
    %c0_14 = arith.constant 0 : index
    %19 = vector.load %arg12[%c4_13, %c0_14] : memref<8x512xf32, #tpu.memory_space<vmem>>, vector<1x512xf32>
    tpu.vector_store %arg12[%c4_13, %c0_14], %18 {strides = array<i32>} : memref<8x512xf32, #tpu.memory_space<vmem>>, vector<1x512xf32>,
    %c5 = arith.constant 5 : index
    %20 = memref.load %arg0[%c5] : memref<8xi32, #tpu.memory_space<smem>>
    %21 = arith.index_cast %20 : i32 to index
    %c0_15 = arith.constant 0 : index
    %22 = vector.load %arg3[%21, %c0_15] : memref<128x512xf32, #tpu.memory_space<vmem>>, vector<1x512xf32>
    %c5_16 = arith.constant 5 : index
    %c0_17 = arith.constant 0 : index
    %23 = vector.load %arg12[%c5_16, %c0_17] : memref<8x512xf32, #tpu.memory_space<vmem>>, vector<1x512xf32>
    tpu.vector_store %arg12[%c5_16, %c0_17], %22 {strides = array<i32>} : memref<8x512xf32, #tpu.memory_space<vmem>>, vector<1x512xf32>,
    %c6 = arith.constant 6 : index
    %24 = memref.load %arg0[%c6] : memref<8xi32, #tpu.memory_space<smem>>
    %25 = arith.index_cast %24 : i32 to index
    %c0_18 = arith.constant 0 : index
    %26 = vector.load %arg3[%25, %c0_18] : memref<128x512xf32, #tpu.memory_space<vmem>>, vector<1x512xf32>
    %c6_19 = arith.constant 6 : index
    %c0_20 = arith.constant 0 : index
    %27 = vector.load %arg12[%c6_19, %c0_20] : memref<8x512xf32, #tpu.memory_space<vmem>>, vector<1x512xf32>
    tpu.vector_store %arg12[%c6_19, %c0_20], %26 {strides = array<i32>} : memref<8x512xf32, #tpu.memory_space<vmem>>, vector<1x512xf32>,
    %c7 = arith.constant 7 : index
    %28 = memref.load %arg0[%c7] : memref<8xi32, #tpu.memory_space<smem>>
    %29 = arith.index_cast %28 : i32 to index
    %c0_21 = arith.constant 0 : index
    %30 = vector.load %arg3[%29, %c0_21] : memref<128x512xf32, #tpu.memory_space<vmem>>, vector<1x512xf32>
    %c7_22 = arith.constant 7 : index
    %c0_23 = arith.constant 0 : index
    %31 = vector.load %arg12[%c7_22, %c0_23] : memref<8x512xf32, #tpu.memory_space<vmem>>, vector<1x512xf32>
    tpu.vector_store %arg12[%c7_22, %c0_23], %30 {strides = array<i32>} : memref<8x512xf32, #tpu.memory_space<vmem>>, vector<1x512xf32>,
    %c0_24 = arith.constant 0 : index
    %c0_25 = arith.constant 0 : index
    %32 = vector.load %arg12[%c0_24, %c0_25] : memref<8x512xf32, #tpu.memory_space<vmem>>, vector<8x512xf32>
    %c0_26 = arith.constant 0 : index
    %c0_27 = arith.constant 0 : index
    %c0_28 = arith.constant 0 : index
    %33 = vector.load %arg1[%c0_26, %c0_27, %c0_28] : memref<2x8x128xf32, #tpu.memory_space<vmem>>, vector<1x8x128xf32>
    %34 = vector.shape_cast %33 : vector<1x8x128xf32> to vector<8x128xf32>
    %35 = arith.truncf %34 : vector<8x128xf32> to vector<8x128xbf16>
    %c0_29 = arith.constant 0 : index
    %c0_30 = arith.constant 0 : index
    %36 = vector.load %arg4[%c0_29, %c0_30] : memref<128x512xbf16, #tpu.memory_space<vmem>>, vector<128x512xbf16>
    %cst = arith.constant dense<0.000000e+00> : vector<8x512xf32>
    %37 = tpu.matmul %35, %36, %cst {dimension_numbers = #tpu.dot_dimension_numbers<[1], [0], [0], [1], [0, 0, 1, 1], [], []>} : vector<8x128xbf16>, vector<128x512xbf16>, vector<8x512xf32> -> vector<8x512xf32>
    %38 = arith.addf %32, %37 : vector<8x512xf32>
    %c0_31 = arith.constant 0 : index
    %c0_32 = arith.constant 0 : index
    %c0_33 = arith.constant 0 : index
    %39 = vector.load %arg6[%c0_31, %c0_32, %c0_33] : memref<2x1x512xf32, #tpu.memory_space<vmem>>, vector<1x1x512xf32>
    %40 = vector.shape_cast %39 : vector<1x1x512xf32> to vector<1x512xf32>
    %41 = vector.broadcast %40 : vector<1x512xf32> to vector<8x512xf32>
    %42 = arith.addf %38, %41 : vector<8x512xf32>
    %c0_34 = arith.constant 0 : index
    %c0_35 = arith.constant 0 : index
    %c0_36 = arith.constant 0 : index
    %43 = vector.load %arg2[%c0_34, %c0_35, %c0_36] : memref<2x8x128xf32, #tpu.memory_space<vmem>>, vector<1x8x128xf32>
    %44 = vector.shape_cast %43 : vector<1x8x128xf32> to vector<8x128xf32>
    %45 = vector.extract_strided_slice %42 {offsets = [0, 0], sizes = [8, 128], strides = [1, 1]} : vector<8x512xf32> to vector<8x128xf32>
    %46 = arith.negf %45 : vector<8x128xf32>
    %47 = math.exp %46 : vector<8x128xf32>
    %cst_37 = arith.constant 1.000000e+00 : f32
    %48 = vector.broadcast %cst_37 : f32 to vector<8x128xf32>
    %49 = arith.addf %48, %47 : vector<8x128xf32>
    %50 = arith.divf %48, %49 : vector<8x128xf32>
    %51 = vector.extract_strided_slice %42 {offsets = [0, 128], sizes = [8, 128], strides = [1, 1]} : vector<8x512xf32> to vector<8x128xf32>
    %52 = arith.negf %51 : vector<8x128xf32>
    %53 = math.exp %52 : vector<8x128xf32>
    %cst_38 = arith.constant 1.000000e+00 : f32
    %54 = vector.broadcast %cst_38 : f32 to vector<8x128xf32>
    %55 = arith.addf %54, %53 : vector<8x128xf32>
    %56 = arith.divf %54, %55 : vector<8x128xf32>
    %57 = vector.extract_strided_slice %42 {offsets = [0, 256], sizes = [8, 128], strides = [1, 1]} : vector<8x512xf32> to vector<8x128xf32>
    %58 = math.tanh %57 : vector<8x128xf32>
    %59 = vector.extract_strided_slice %42 {offsets = [0, 384], sizes = [8, 128], strides = [1, 1]} : vector<8x512xf32> to vector<8x128xf32>
    %60 = arith.negf %59 : vector<8x128xf32>
    %61 = math.exp %60 : vector<8x128xf32>
    %cst_39 = arith.constant 1.000000e+00 : f32
    %62 = vector.broadcast %cst_39 : f32 to vector<8x128xf32>
    %63 = arith.addf %62, %61 : vector<8x128xf32>
    %64 = arith.divf %62, %63 : vector<8x128xf32>
    %65 = arith.mulf %56, %44 : vector<8x128xf32>
    %66 = arith.mulf %50, %58 : vector<8x128xf32>
    %67 = arith.addf %65, %66 : vector<8x128xf32>
    %68 = math.tanh %67 : vector<8x128xf32>
    %69 = arith.mulf %64, %68 : vector<8x128xf32>
    %c0_40 = arith.constant 0 : index
    %c0_41 = arith.constant 0 : index
    %c0_42 = arith.constant 0 : index
    %70 = vector.load %arg10[%c0_40, %c0_41, %c0_42] : memref<2x8x128xf32, #tpu.memory_space<vmem>>, vector<1x8x128xf32>
    %71 = vector.shape_cast %70 : vector<1x8x128xf32> to vector<8x128xf32>
    %72 = vector.shape_cast %69 : vector<8x128xf32> to vector<1x8x128xf32>
    tpu.vector_store %arg10[%c0_40, %c0_41, %c0_42], %72 {strides = array<i32>} : memref<2x8x128xf32, #tpu.memory_space<vmem>>, vector<1x8x128xf32>,
    %c0_43 = arith.constant 0 : index
    %c0_44 = arith.constant 0 : index
    %c0_45 = arith.constant 0 : index
    %73 = vector.load %arg11[%c0_43, %c0_44, %c0_45] : memref<2x8x128xf32, #tpu.memory_space<vmem>>, vector<1x8x128xf32>
    %74 = vector.shape_cast %73 : vector<1x8x128xf32> to vector<8x128xf32>
    %75 = vector.shape_cast %67 : vector<8x128xf32> to vector<1x8x128xf32>
    tpu.vector_store %arg11[%c0_43, %c0_44, %c0_45], %75 {strides = array<i32>} : memref<2x8x128xf32, #tpu.memory_space<vmem>>, vector<1x8x128xf32>,
    %c1_46 = arith.constant 1 : index
    %c0_47 = arith.constant 0 : index
    %c0_48 = arith.constant 0 : index
    %76 = vector.load %arg1[%c1_46, %c0_47, %c0_48] : memref<2x8x128xf32, #tpu.memory_space<vmem>>, vector<1x8x128xf32>
    %77 = vector.shape_cast %76 : vector<1x8x128xf32> to vector<8x128xf32>
    %78 = tpu.concatenate %69, %77 in 1 : vector<8x128xf32>, vector<8x128xf32> -> vector<8x256xf32>
    %79 = arith.truncf %78 : vector<8x256xf32> to vector<8x256xbf16>
    %c0_49 = arith.constant 0 : index
    %c0_50 = arith.constant 0 : index
    %c0_51 = arith.constant 0 : index
    %80 = vector.load %arg5[%c0_49, %c0_50, %c0_51] : memref<1x256x512xbf16, #tpu.memory_space<vmem>>, vector<1x256x512xbf16>
    %81 = vector.shape_cast %80 : vector<1x256x512xbf16> to vector<256x512xbf16>
    %cst_52 = arith.constant dense<0.000000e+00> : vector<8x512xf32>
    %82 = tpu.matmul %79, %81, %cst_52 {dimension_numbers = #tpu.dot_dimension_numbers<[1], [0], [0], [1], [0, 0, 1, 1], [], []>} : vector<8x256xbf16>, vector<256x512xbf16>, vector<8x512xf32> -> vector<8x512xf32>
    %c1_53 = arith.constant 1 : index
    %c0_54 = arith.constant 0 : index
    %c0_55 = arith.constant 0 : index
    %83 = vector.load %arg6[%c1_53, %c0_54, %c0_55] : memref<2x1x512xf32, #tpu.memory_space<vmem>>, vector<1x1x512xf32>
    %84 = vector.shape_cast %83 : vector<1x1x512xf32> to vector<1x512xf32>
    %85 = vector.broadcast %84 : vector<1x512xf32> to vector<8x512xf32>
    %86 = arith.addf %82, %85 : vector<8x512xf32>
    %c1_56 = arith.constant 1 : index
    %c0_57 = arith.constant 0 : index
    %c0_58 = arith.constant 0 : index
    %87 = vector.load %arg2[%c1_56, %c0_57, %c0_58] : memref<2x8x128xf32, #tpu.memory_space<vmem>>, vector<1x8x128xf32>
    %88 = vector.shape_cast %87 : vector<1x8x128xf32> to vector<8x128xf32>
    %89 = vector.extract_strided_slice %86 {offsets = [0, 0], sizes = [8, 128], strides = [1, 1]} : vector<8x512xf32> to vector<8x128xf32>
    %90 = arith.negf %89 : vector<8x128xf32>
    %91 = math.exp %90 : vector<8x128xf32>
    %cst_59 = arith.constant 1.000000e+00 : f32
    %92 = vector.broadcast %cst_59 : f32 to vector<8x128xf32>
    %93 = arith.addf %92, %91 : vector<8x128xf32>
    %94 = arith.divf %92, %93 : vector<8x128xf32>
    %95 = vector.extract_strided_slice %86 {offsets = [0, 128], sizes = [8, 128], strides = [1, 1]} : vector<8x512xf32> to vector<8x128xf32>
    %96 = arith.negf %95 : vector<8x128xf32>
    %97 = math.exp %96 : vector<8x128xf32>
    %cst_60 = arith.constant 1.000000e+00 : f32
    %98 = vector.broadcast %cst_60 : f32 to vector<8x128xf32>
    %99 = arith.addf %98, %97 : vector<8x128xf32>
    %100 = arith.divf %98, %99 : vector<8x128xf32>
    %101 = vector.extract_strided_slice %86 {offsets = [0, 256], sizes = [8, 128], strides = [1, 1]} : vector<8x512xf32> to vector<8x128xf32>
    %102 = math.tanh %101 : vector<8x128xf32>
    %103 = vector.extract_strided_slice %86 {offsets = [0, 384], sizes = [8, 128], strides = [1, 1]} : vector<8x512xf32> to vector<8x128xf32>
    %104 = arith.negf %103 : vector<8x128xf32>
    %105 = math.exp %104 : vector<8x128xf32>
    %cst_61 = arith.constant 1.000000e+00 : f32
    %106 = vector.broadcast %cst_61 : f32 to vector<8x128xf32>
    %107 = arith.addf %106, %105 : vector<8x128xf32>
    %108 = arith.divf %106, %107 : vector<8x128xf32>
    %109 = arith.mulf %100, %88 : vector<8x128xf32>
    %110 = arith.mulf %94, %102 : vector<8x128xf32>
    %111 = arith.addf %109, %110 : vector<8x128xf32>
    %112 = math.tanh %111 : vector<8x128xf32>
    %113 = arith.mulf %108, %112 : vector<8x128xf32>
    %c1_62 = arith.constant 1 : index
    %c0_63 = arith.constant 0 : index
    %c0_64 = arith.constant 0 : index
    %114 = vector.load %arg10[%c1_62, %c0_63, %c0_64] : memref<2x8x128xf32, #tpu.memory_space<vmem>>, vector<1x8x128xf32>
    %115 = vector.shape_cast %114 : vector<1x8x128xf32> to vector<8x128xf32>
    %116 = vector.shape_cast %113 : vector<8x128xf32> to vector<1x8x128xf32>
    tpu.vector_store %arg10[%c1_62, %c0_63, %c0_64], %116 {strides = array<i32>} : memref<2x8x128xf32, #tpu.memory_space<vmem>>, vector<1x8x128xf32>,
    %c1_65 = arith.constant 1 : index
    %c0_66 = arith.constant 0 : index
    %c0_67 = arith.constant 0 : index
    %117 = vector.load %arg11[%c1_65, %c0_66, %c0_67] : memref<2x8x128xf32, #tpu.memory_space<vmem>>, vector<1x8x128xf32>
    %118 = vector.shape_cast %117 : vector<1x8x128xf32> to vector<8x128xf32>
    %119 = vector.shape_cast %111 : vector<8x128xf32> to vector<1x8x128xf32>
    tpu.vector_store %arg11[%c1_65, %c0_66, %c0_67], %119 {strides = array<i32>} : memref<2x8x128xf32, #tpu.memory_space<vmem>>, vector<1x8x128xf32>,
    %120 = arith.truncf %113 : vector<8x128xf32> to vector<8x128xbf16>
    %c0_68 = arith.constant 0 : index
    %c0_69 = arith.constant 0 : index
    %121 = vector.load %arg7[%c0_68, %c0_69] : memref<128x128xbf16, #tpu.memory_space<vmem>>, vector<128x128xbf16>
    %cst_70 = arith.constant dense<0.000000e+00> : vector<8x128xf32>
    %122 = tpu.matmul %120, %121, %cst_70 {dimension_numbers = #tpu.dot_dimension_numbers<[1], [0], [0], [1], [0, 0, 1, 1], [], []>} : vector<8x128xbf16>, vector<128x128xbf16>, vector<8x128xf32> -> vector<8x128xf32>
    %c0_71 = arith.constant 0 : index
    %c0_72 = arith.constant 0 : index
    %123 = vector.load %arg8[%c0_71, %c0_72] : memref<1x128xf32, #tpu.memory_space<vmem>>, vector<1x128xf32>
    %124 = vector.broadcast %123 : vector<1x128xf32> to vector<8x128xf32>
    %125 = arith.addf %122, %124 : vector<8x128xf32>
    %c0_73 = arith.constant 0 : index
    %c0_74 = arith.constant 0 : index
    %126 = vector.load %arg9[%c0_73, %c0_74] : memref<8x128xf32, #tpu.memory_space<vmem>>, vector<8x128xf32>
    tpu.vector_store %arg9[%c0_73, %c0_74], %125 {strides = array<i32>} : memref<8x128xf32, #tpu.memory_space<vmem>>, vector<8x128xf32>,
    return
  }
}

</mosaic_0001>

<llo_original>
// kernel: rnn_forward.1
$region0: #{rnn_forward.1}
  #allocation0 [shape = 'u32[]', space=smem, size = 0x4, offset = 0x4, fixed_abs, tag = 'smem constant byte address 0x4 - core index']
  #allocation1 [shape = 'u32[72,128]{1,0:T(1,128)}', space=vmem, size = 0x9000, scoped, tag = 'internal scratch']
  #allocation2 [shape = 'f32[8,512]{1,0:T(8,128)}', space=vmem, size = 0x4000, scoped, tag = 'scratch operand']
  %s0 = inlined_call_operand.vmem [shape: s32[8], index: 0, kind: input, shape index: {}]
  %s1 = inlined_call_operand.hbm [shape: f32[2,8,128], index: 1, kind: input, shape index: {}, may-alias: {1,10}]
  %s2 = inlined_call_operand.hbm [shape: f32[2,8,128], index: 2, kind: input, shape index: {}, may-alias: {2,11}]
  %s3 = inlined_call_operand.hbm [shape: f32[128,512], index: 3, kind: input, shape index: {}]
  %s4 = inlined_call_operand.hbm [shape: bf16[128,512], index: 4, kind: input, shape index: {}]
  %s5 = inlined_call_operand.hbm [shape: bf16[1,256,512], index: 5, kind: input, shape index: {}]
  %s6 = inlined_call_operand.vmem [shape: f32[2,1,512], index: 6, kind: input, shape index: {}]
  %s7 = inlined_call_operand.hbm [shape: bf16[128,128], index: 7, kind: input, shape index: {}]
  %s8 = inlined_call_operand.vmem [shape: f32[1,128], index: 8, kind: input, shape index: {}]
  %s9 = inlined_call_operand.hbm [shape: f32[8,128], index: 9, kind: output, shape index: {0}]
  %s10 = inlined_call_operand.hbm [shape: f32[2,8,128], index: 10, kind: output, shape index: {1}, may-alias: {1,10}]
  %s11 = inlined_call_operand.hbm [shape: f32[2,8,128], index: 11, kind: output, shape index: {2}, may-alias: {2,11}]
  %12 = xla_tuple %s9, %s10, %s11
  %s13 = sld [smem:[#allocation0]]
  $region90: #{rnn_forward.1} parent=0
    _
  %s15 = ssub.s32 1, %s13
  %s16 = scalar_select 0, %s15, %s13
  $region1: #{rnn_forward.1} parent=0
    #allocation3 [shape = 'u8[512]{0}', space=smem, size = 0x200, scoped, tag = 'input window, operand 0, single buffered']
    #allocation4 [shape = 's32[1]{0}', space=sflag, size = 0x4, scoped, tag = 'scoped memory for rnn_forward.1']
    #allocation5 [shape = 's32[1]{0}', space=sflag, size = 0x4, scoped, tag = 'scoped memory for rnn_forward.1']
    #allocation6 [shape = 's32[1]{0}', space=sflag, size = 0x4, scoped, tag = 'scoped memory for rnn_forward.1']
    #allocation7 [shape = 'u8[8192]{0}', space=vmem, size = 0x2000, scoped, tag = 'input window, operand 1, single buffered']
    #allocation8 [shape = 'u8[8192]{0}', space=vmem, size = 0x2000, scoped, tag = 'input window, operand 2, single buffered']
    #allocation9 [shape = 's32[1]{0}', space=sflag, size = 0x4, scoped, tag = 'scoped memory for rnn_forward.1']
    #allocation10 [shape = 'u8[262144]{0}', space=vmem, size = 0x40000, scoped, tag = 'input window, operand 3, single buffered']
    #allocation11 [shape = 'u8[131072]{0}', space=vmem, size = 0x20000, scoped, tag = 'input window, operand 4, single buffered']
    #allocation12 [shape = 's32[1]{0}', space=sflag, size = 0x4, scoped, tag = 'scoped memory for rnn_forward.1']
    #allocation13 [shape = 'u8[262144]{0}', space=vmem, size = 0x40000, scoped, tag = 'input window, operand 5, single buffered']
    #allocation14 [shape = 'u8[32768]{0}', space=vmem, size = 0x8000, scoped, tag = 'input window, operand 7, single buffered']
    #allocation15 [shape = 's32[1]{0}', space=sflag, size = 0x4, scoped, tag = 'scoped memory for rnn_forward.1']
    #allocation16 [shape = 'u8[4096]{0}', space=vmem, size = 0x1000, scoped, tag = 'output window, operand 0, single buffered']
    #allocation17 [shape = 'u8[8192]{0}', space=vmem, size = 0x2000, scoped, tag = 'output window, operand 1, single buffered']
    #allocation18 [shape = 's32[1]{0}', space=sflag, size = 0x4, scoped, tag = 'scoped memory for rnn_forward.1']
    #allocation19 [shape = 'u8[8192]{0}', space=vmem, size = 0x2000, scoped, tag = 'output window, operand 2, single buffered']
    %17 = vsyncpa [#allocation6], 0
    %18 = vsyncpa [#allocation4], 0
    %19 = vsyncpa [#allocation9], 0
    %20 = vsyncpa [#allocation12], 0
    %21 = vsyncpa [#allocation15], 0
    %22 = vsyncpa [#allocation5], 0
    %23 = vsyncpa [#allocation18], 0
    // Predicated region
    $region2: #{rnn_forward.1} parent=1 // pred_check
      _
    $region3: #{rnn_forward.1} parent=1 // pred_check_branch
      %25 = sbr.rel (0) target = $region5
    $region4: #{rnn_forward.1} parent=1 // pred_region
      %27 = vsyncadd [#allocation6], 0
      %s29 = sshll.u32 %s0, 4
      %s30 = int_to_ptr.vmem [resolvable:$true] %s29
      %32 = dma.vmem_to_smem %s30, 16, [#allocation3], [#allocation6]
    $region5: #{rnn_forward.1} parent=1 // pred_fallthru
      _
    // Predicated region
    $region6: #{rnn_forward.1} parent=1 // pred_check
      _
    $region7: #{rnn_forward.1} parent=1 // pred_check_branch
      %34 = sbr.rel (0) target = $region9
    $region8: #{rnn_forward.1} parent=1 // pred_region
      %36 = vsyncadd [#allocation4], 0
      %s37 = sshll.u32 %s1, 4
      %s38 = int_to_ptr.hbm [resolvable:$true] %s37
      %s39 = sshll.u32 [#allocation7], 4
      %s40 = int_to_ptr.vmem [resolvable:$true] %s39
      %45 = dma.hbm_to_vmem [thread:$0]  %s38, 256, %s40, [#allocation4], 128, 128, 8
    $region9: #{rnn_forward.1} parent=1 // pred_fallthru
      _
    // Predicated region
    $region10: #{rnn_forward.1} parent=1 // pred_check
      _
    $region11: #{rnn_forward.1} parent=1 // pred_check_branch
      %47 = sbr.rel (0) target = $region13
    $region12: #{rnn_forward.1} parent=1 // pred_region
      %49 = vsyncadd [#allocation9], 0
      %s50 = sshll.u32 %s2, 4
      %s51 = int_to_ptr.hbm [resolvable:$true] %s50
      %s52 = sshll.u32 [#allocation8], 4
      %s53 = int_to_ptr.vmem [resolvable:$true] %s52
      %58 = dma.hbm_to_vmem [thread:$0]  %s51, 256, %s53, [#allocation9], 128, 128, 8
    $region13: #{rnn_forward.1} parent=1 // pred_fallthru
      _
    // Predicated region
    $region14: #{rnn_forward.1} parent=1 // pred_check
      _
    $region15: #{rnn_forward.1} parent=1 // pred_check_branch
      %60 = sbr.rel (0) target = $region17
    $region16: #{rnn_forward.1} parent=1 // pred_region
      %62 = vsyncadd [#allocation9], 0
      %s63 = sshll.u32 %s3, 4
      %s64 = int_to_ptr.hbm [resolvable:$true] %s63
      %s65 = sshll.u32 [#allocation10], 4
      %s66 = int_to_ptr.vmem [resolvable:$true] %s65
      %71 = dma.hbm_to_vmem [thread:$0]  %s64, 8192, %s66, [#allocation9], 512, 512, 32
    $region17: #{rnn_forward.1} parent=1 // pred_fallthru
      _
    // Predicated region
    $region18: #{rnn_forward.1} parent=1 // pred_check
      _
    $region19: #{rnn_forward.1} parent=1 // pred_check_branch
      %73 = sbr.rel (0) target = $region21
    $region20: #{rnn_forward.1} parent=1 // pred_region
      %75 = vsyncadd [#allocation12], 0
      %s76 = sshll.u32 %s4, 4
      %s77 = int_to_ptr.hbm [resolvable:$true] %s76
      %s78 = sshll.u32 [#allocation11], 4
      %s79 = int_to_ptr.vmem [resolvable:$true] %s78
      %84 = dma.hbm_to_vmem [thread:$0]  %s77, 4096, %s79, [#allocation12], 256, 256, 16
    $region21: #{rnn_forward.1} parent=1 // pred_fallthru
      _
    // Predicated region
    $region22: #{rnn_forward.1} parent=1 // pred_check
      _
    $region23: #{rnn_forward.1} parent=1 // pred_check_branch
      %86 = sbr.rel (0) target = $region25
    $region24: #{rnn_forward.1} parent=1 // pred_region
      %88 = vsyncadd [#allocation12], 0
      %s89 = sshll.u32 %s5, 4
      %s90 = int_to_ptr.hbm [resolvable:$true] %s89
      %s91 = sshll.u32 [#allocation13], 4
      %s92 = int_to_ptr.vmem [resolvable:$true] %s91
      %97 = dma.hbm_to_vmem [thread:$0]  %s90, 8192, %s92, [#allocation12], 256, 256, 16
    $region25: #{rnn_forward.1} parent=1 // pred_fallthru
      _
    // Predicated region
    $region26: #{rnn_forward.1} parent=1 // pred_check
      _
    $region27: #{rnn_forward.1} parent=1 // pred_check_branch
      %99 = sbr.rel (0) target = $region29
    $region28: #{rnn_forward.1} parent=1 // pred_region
      _
    $region29: #{rnn_forward.1} parent=1 // pred_fallthru
      _
    // Predicated region
    $region30: #{rnn_forward.1} parent=1 // pred_check
      _
    $region31: #{rnn_forward.1} parent=1 // pred_check_branch
      %101 = sbr.rel (0) target = $region33
    $region32: #{rnn_forward.1} parent=1 // pred_region
      %103 = vsyncadd [#allocation15], 0
      %s104 = sshll.u32 %s7, 4
      %s105 = int_to_ptr.hbm [resolvable:$true] %s104
      %s106 = sshll.u32 [#allocation14], 4
      %s107 = int_to_ptr.vmem [resolvable:$true] %s106
      %112 = dma.hbm_to_vmem [thread:$0]  %s105, 1024, %s107, [#allocation15], 64, 64, 4
    $region33: #{rnn_forward.1} parent=1 // pred_fallthru
      _
    // Predicated region
    $region34: #{rnn_forward.1} parent=1 // pred_check
      _
    $region35: #{rnn_forward.1} parent=1 // pred_check_branch
      %114 = sbr.rel (0) target = $region37
    $region36: #{rnn_forward.1} parent=1 // pred_region
      _
    $region37: #{rnn_forward.1} parent=1 // pred_fallthru
      _
    // Predicated region
    $region38: #{rnn_forward.1} parent=1 // pred_check
      _
    $region39: #{rnn_forward.1} parent=1 // pred_check_branch
      %116 = sbr.rel (0) target = $region41
    $region40: #{rnn_forward.1} parent=1 // pred_region
      %118 = dma.done [#allocation6], 16
    $region41: #{rnn_forward.1} parent=1 // pred_fallthru
      _
    // Predicated region
    $region42: #{rnn_forward.1} parent=1 // pred_check
      _
    $region43: #{rnn_forward.1} parent=1 // pred_check_branch
      %120 = sbr.rel (0) target = $region45
    $region44: #{rnn_forward.1} parent=1 // pred_region
      %122 = dma.done [#allocation4], 256
    $region45: #{rnn_forward.1} parent=1 // pred_fallthru
      _
    // Predicated region
    $region46: #{rnn_forward.1} parent=1 // pred_check
      _
    $region47: #{rnn_forward.1} parent=1 // pred_check_branch
      %124 = sbr.rel (0) target = $region49
    $region48: #{rnn_forward.1} parent=1 // pred_region
      %126 = dma.done [#allocation9], 256
    $region49: #{rnn_forward.1} parent=1 // pred_fallthru
      _
    // Predicated region
    $region50: #{rnn_forward.1} parent=1 // pred_check
      _
    $region51: #{rnn_forward.1} parent=1 // pred_check_branch
      %128 = sbr.rel (0) target = $region53
    $region52: #{rnn_forward.1} parent=1 // pred_region
      %130 = dma.done [#allocation9], 8192
    $region53: #{rnn_forward.1} parent=1 // pred_fallthru
      _
    // Predicated region
    $region54: #{rnn_forward.1} parent=1 // pred_check
      _
    $region55: #{rnn_forward.1} parent=1 // pred_check_branch
      %132 = sbr.rel (0) target = $region57
    $region56: #{rnn_forward.1} parent=1 // pred_region
      %134 = dma.done [#allocation12], 4096
    $region57: #{rnn_forward.1} parent=1 // pred_fallthru
      _
    // Predicated region
    $region58: #{rnn_forward.1} parent=1 // pred_check
      _
    $region59: #{rnn_forward.1} parent=1 // pred_check_branch
      %136 = sbr.rel (0) target = $region61
    $region60: #{rnn_forward.1} parent=1 // pred_region
      %138 = dma.done [#allocation12], 8192
    $region61: #{rnn_forward.1} parent=1 // pred_fallthru
      _
    // Predicated region
    $region62: #{rnn_forward.1} parent=1 // pred_check
      _
    $region63: #{rnn_forward.1} parent=1 // pred_check_branch
      %140 = sbr.rel (0) target = $region65
    $region64: #{rnn_forward.1} parent=1 // pred_region
      %142 = dma.done [#allocation15], 1024
    $region65: #{rnn_forward.1} parent=1 // pred_fallthru
      _
    %143 = sfence
    %s144 = sld [smem:[#allocation3]]
    %s145 = sshra.s32 %s144, 3
    %s146 = sand.u32 %s144, 7
    %s147 = sshra.s32 %s144, 3
    %s148 = sand.u32 %s144, 7
    %s149 = smul.u32 %s145, 4
    %s150 = smul.u32 %s149, 8
    %s151 = sadd.s32 %s150, %s148
    %s152 = scalar_lea.vmem [#allocation10], %s151
    %v153 = vld [vmem:[%s152] ss:$8 sm:$0xf]
    %v154 = vlaneseq
    %vm155 = vcmp.ge.s32.totalorder %v154, 0
    %vm156 = vcmp.lt.s32.totalorder %v154, 512
    %vm157 = vmand %vm155, %vm156
    %158 = vst.msk [vmem:[#allocation2] ss:$8 sm:$0xf] %vm157, %v153
    %159 = vst.msk [vmem:[#allocation2] ss:$8 sm:$0x0] %vm157, %v153
    %s160 = sld [smem:[#allocation3 + $0x1]]
    %s161 = sshra.s32 %s160, 3
    %s162 = sand.u32 %s160, 7
    %s163 = sshra.s32 %s160, 3
    %s164 = sand.u32 %s160, 7
    %s165 = smul.u32 %s161, 4
    %s166 = smul.u32 %s165, 8
    %s167 = sadd.s32 %s166, %s164
    %s168 = scalar_lea.vmem [#allocation10], %s167
    %v169 = vld [vmem:[%s168] ss:$8 sm:$0xf]
    %s170 = scalar_lea.vmem [#allocation2], 1
    %171 = vst.msk [vmem:[%s170] ss:$8 sm:$0xf] %vm157, %v169
    %172 = vst.msk [vmem:[%s170] ss:$8 sm:$0x0] %vm157, %v169
    %s173 = sld [smem:[#allocation3 + $0x2]]
    %s174 = sshra.s32 %s173, 3
    %s175 = sand.u32 %s173, 7
    %s176 = sshra.s32 %s173, 3
    %s177 = sand.u32 %s173, 7
    %s178 = smul.u32 %s174, 4
    %s179 = smul.u32 %s178, 8
    %s180 = sadd.s32 %s179, %s177
    %s181 = scalar_lea.vmem [#allocation10], %s180
    %v182 = vld [vmem:[%s181] ss:$8 sm:$0xf]
    %s183 = scalar_lea.vmem [#allocation2], 2
    %184 = vst.msk [vmem:[%s183] ss:$8 sm:$0xf] %vm157, %v182
    %185 = vst.msk [vmem:[%s183] ss:$8 sm:$0x0] %vm157, %v182
    %s186 = sld [smem:[#allocation3 + $0x3]]
    %s187 = sshra.s32 %s186, 3
    %s188 = sand.u32 %s186, 7
    %s189 = sshra.s32 %s186, 3
    %s190 = sand.u32 %s186, 7
    %s191 = smul.u32 %s187, 4
    %s192 = smul.u32 %s191, 8
    %s193 = sadd.s32 %s192, %s190
    %s194 = scalar_lea.vmem [#allocation10], %s193
    %v195 = vld [vmem:[%s194] ss:$8 sm:$0xf]
    %s196 = scalar_lea.vmem [#allocation2], 3
    %197 = vst.msk [vmem:[%s196] ss:$8 sm:$0xf] %vm157, %v195
    %198 = vst.msk [vmem:[%s196] ss:$8 sm:$0x0] %vm157, %v195
    %s199 = sld [smem:[#allocation3 + $0x4]]
    %s200 = sshra.s32 %s199, 3
    %s201 = sand.u32 %s199, 7
    %s202 = sshra.s32 %s199, 3
    %s203 = sand.u32 %s199, 7
    %s204 = smul.u32 %s200, 4
    %s205 = smul.u32 %s204, 8
    %s206 = sadd.s32 %s205, %s203
    %s207 = scalar_lea.vmem [#allocation10], %s206
    %v208 = vld [vmem:[%s207] ss:$8 sm:$0xf]
    %s209 = scalar_lea.vmem [#allocation2], 4
    %210 = vst.msk [vmem:[%s209] ss:$8 sm:$0xf] %vm157, %v208
    %211 = vst.msk [vmem:[%s209] ss:$8 sm:$0x0] %vm157, %v208
    %s212 = sld [smem:[#allocation3 + $0x5]]
    %s213 = sshra.s32 %s212, 3
    %s214 = sand.u32 %s212, 7
    %s215 = sshra.s32 %s212, 3
    %s216 = sand.u32 %s212, 7
    %s217 = smul.u32 %s213, 4
    %s218 = smul.u32 %s217, 8
    %s219 = sadd.s32 %s218, %s216
    %s220 = scalar_lea.vmem [#allocation10], %s219
    %v221 = vld [vmem:[%s220] ss:$8 sm:$0xf]
    %s222 = scalar_lea.vmem [#allocation2], 5
    %223 = vst.msk [vmem:[%s222] ss:$8 sm:$0xf] %vm157, %v221
    %224 = vst.msk [vmem:[%s222] ss:$8 sm:$0x0] %vm157, %v221
    %s225 = sld [smem:[#allocation3 + $0x6]]
    %s226 = sshra.s32 %s225, 3
    %s227 = sand.u32 %s225, 7
    %s228 = sshra.s32 %s225, 3
    %s229 = sand.u32 %s225, 7
    %s230 = smul.u32 %s226, 4
    %s231 = smul.u32 %s230, 8
    %s232 = sadd.s32 %s231, %s229
    %s233 = scalar_lea.vmem [#allocation10], %s232
    %v234 = vld [vmem:[%s233] ss:$8 sm:$0xf]
    %s235 = scalar_lea.vmem [#allocation2], 6
    %236 = vst.msk [vmem:[%s235] ss:$8 sm:$0xf] %vm157, %v234
    %237 = vst.msk [vmem:[%s235] ss:$8 sm:$0x0] %vm157, %v234
    %s238 = sld [smem:[#allocation3 + $0x7]]
    %s239 = sshra.s32 %s238, 3
    %s240 = sand.u32 %s238, 7
    %s241 = sshra.s32 %s238, 3
    %s242 = sand.u32 %s238, 7
    %s243 = smul.u32 %s239, 4
    %s244 = smul.u32 %s243, 8
    %s245 = sadd.s32 %s244, %s242
    %s246 = scalar_lea.vmem [#allocation10], %s245
    %v247 = vld [vmem:[%s246] ss:$8 sm:$0xf]
    %s248 = scalar_lea.vmem [#allocation2], 7
    %249 = vst.msk [vmem:[%s248] ss:$8 sm:$0xf] %vm157, %v247
    %250 = vst.msk [vmem:[%s248] ss:$8 sm:$0x0] %vm157, %v247
    %v251 = vld [vmem:[#allocation2] sm:$0xff]
    %v252 = vld [vmem:[#allocation2 + $0x8] sm:$0xff]
    %v253 = vld [vmem:[#allocation2 + $0x10] sm:$0xff]
    %v254 = vld [vmem:[#allocation2 + $0x18] sm:$0xff]
    %v255 = vld [vmem:[#allocation7] sm:$0xff]
    %v256 = vpack.c.bf16 %v255, %v255
    %v257 = vld [vmem:[#allocation11] sm:$0xff]
    %v258 = vld [vmem:[#allocation11 + $0x8] sm:$0xff]
    %v259 = vld [vmem:[#allocation11 + $0x10] sm:$0xff]
    %v260 = vld [vmem:[#allocation11 + $0x18] sm:$0xff]
    %v261 = vld [vmem:[#allocation11 + $0x20] sm:$0xff]
    %v262 = vld [vmem:[#allocation11 + $0x28] sm:$0xff]
    %v263 = vld [vmem:[#allocation11 + $0x30] sm:$0xff]
    %v264 = vld [vmem:[#allocation11 + $0x38] sm:$0xff]
    %v265 = vld [vmem:[#allocation11 + $0x40] sm:$0xff]
    %v266 = vld [vmem:[#allocation11 + $0x48] sm:$0xff]
    %v267 = vld [vmem:[#allocation11 + $0x50] sm:$0xff]
    %v268 = vld [vmem:[#allocation11 + $0x58] sm:$0xff]
    %v269 = vld [vmem:[#allocation11 + $0x60] sm:$0xff]
    %v270 = vld [vmem:[#allocation11 + $0x68] sm:$0xff]
    %v271 = vld [vmem:[#allocation11 + $0x70] sm:$0xff]
    %v272 = vld [vmem:[#allocation11 + $0x78] sm:$0xff]
    %v273 = vld [vmem:[#allocation11 + $0x80] sm:$0xff]
    %v274 = vld [vmem:[#allocation11 + $0x88] sm:$0xff]
    %v275 = vld [vmem:[#allocation11 + $0x90] sm:$0xff]
    %v276 = vld [vmem:[#allocation11 + $0x98] sm:$0xff]
    %v277 = vld [vmem:[#allocation11 + $0xa0] sm:$0xff]
    %v278 = vld [vmem:[#allocation11 + $0xa8] sm:$0xff]
    %v279 = vld [vmem:[#allocation11 + $0xb0] sm:$0xff]
    %v280 = vld [vmem:[#allocation11 + $0xb8] sm:$0xff]
    %v281 = vld [vmem:[#allocation11 + $0xc0] sm:$0xff]
    %v282 = vld [vmem:[#allocation11 + $0xc8] sm:$0xff]
    %v283 = vld [vmem:[#allocation11 + $0xd0] sm:$0xff]
    %v284 = vld [vmem:[#allocation11 + $0xd8] sm:$0xff]
    %v285 = vld [vmem:[#allocation11 + $0xe0] sm:$0xff]
    %v286 = vld [vmem:[#allocation11 + $0xe8] sm:$0xff]
    %v287 = vld [vmem:[#allocation11 + $0xf0] sm:$0xff]
    %v288 = vld [vmem:[#allocation11 + $0xf8] sm:$0xff]
    %v321 = vunpack.c.l.b16 %v257
    %v322 = vunpack.c.h.b16 %v257
    %v323 = vunpack.c.l.b16 %v258
    %v324 = vunpack.c.h.b16 %v258
    %v325 = vunpack.c.l.b16 %v259
    %v326 = vunpack.c.h.b16 %v259
    %v327 = vunpack.c.l.b16 %v260
    %v328 = vunpack.c.h.b16 %v260
    %v329 = vunpack.c.l.b16 %v261
    %v330 = vunpack.c.h.b16 %v261
    %v331 = vunpack.c.l.b16 %v262
    %v332 = vunpack.c.h.b16 %v262
    %v333 = vunpack.c.l.b16 %v263
    %v334 = vunpack.c.h.b16 %v263
    %v335 = vunpack.c.l.b16 %v264
    %v336 = vunpack.c.h.b16 %v264
    %v337 = vunpack.c.l.b16 %v265
    %v338 = vunpack.c.h.b16 %v265
    %v339 = vunpack.c.l.b16 %v266
    %v340 = vunpack.c.h.b16 %v266
    %v341 = vunpack.c.l.b16 %v267
    %v342 = vunpack.c.h.b16 %v267
    %v343 = vunpack.c.l.b16 %v268
    %v344 = vunpack.c.h.b16 %v268
    %v345 = vunpack.c.l.b16 %v269
    %v346 = vunpack.c.h.b16 %v269
    %v347 = vunpack.c.l.b16 %v270
    %v348 = vunpack.c.h.b16 %v270
    %v349 = vunpack.c.l.b16 %v271
    %v350 = vunpack.c.h.b16 %v271
    %v351 = vunpack.c.l.b16 %v272
    %v352 = vunpack.c.h.b16 %v272
    %v353 = vunpack.c.l.b16 %v273
    %v354 = vunpack.c.h.b16 %v273
    %v355 = vunpack.c.l.b16 %v274
    %v356 = vunpack.c.h.b16 %v274
    %v357 = vunpack.c.l.b16 %v275
    %v358 = vunpack.c.h.b16 %v275
    %v359 = vunpack.c.l.b16 %v276
    %v360 = vunpack.c.h.b16 %v276
    %v361 = vunpack.c.l.b16 %v277
    %v362 = vunpack.c.h.b16 %v277
    %v363 = vunpack.c.l.b16 %v278
    %v364 = vunpack.c.h.b16 %v278
    %v365 = vunpack.c.l.b16 %v279
    %v366 = vunpack.c.h.b16 %v279
    %v367 = vunpack.c.l.b16 %v280
    %v368 = vunpack.c.h.b16 %v280
    %v369 = vunpack.c.l.b16 %v281
    %v370 = vunpack.c.h.b16 %v281
    %v371 = vunpack.c.l.b16 %v282
    %v372 = vunpack.c.h.b16 %v282
    %v373 = vunpack.c.l.b16 %v283
    %v374 = vunpack.c.h.b16 %v283
    %v375 = vunpack.c.l.b16 %v284
    %v376 = vunpack.c.h.b16 %v284
    %v377 = vunpack.c.l.b16 %v285
    %v378 = vunpack.c.h.b16 %v285
    %v379 = vunpack.c.l.b16 %v286
    %v380 = vunpack.c.h.b16 %v286
    %v381 = vunpack.c.l.b16 %v287
    %v382 = vunpack.c.h.b16 %v287
    %v383 = vunpack.c.l.b16 %v288
    %v384 = vunpack.c.h.b16 %v288
    %v385 = vpack.c.b16 %v325, %v321
    %v386 = vpack.c.b16 %v326, %v322
    %v387 = vpack.c.b16 %v327, %v323
    %v388 = vpack.c.b16 %v328, %v324
    %v389 = vpack.c.b16 %v333, %v329
    %v390 = vpack.c.b16 %v334, %v330
    %v391 = vpack.c.b16 %v335, %v331
    %v392 = vpack.c.b16 %v336, %v332
    %v393 = vpack.c.b16 %v341, %v337
    %v394 = vpack.c.b16 %v342, %v338
    %v395 = vpack.c.b16 %v343, %v339
    %v396 = vpack.c.b16 %v344, %v340
    %v397 = vpack.c.b16 %v349, %v345
    %v398 = vpack.c.b16 %v350, %v346
    %v399 = vpack.c.b16 %v351, %v347
    %v400 = vpack.c.b16 %v352, %v348
    %v401 = vpack.c.b16 %v357, %v353
    %v402 = vpack.c.b16 %v358, %v354
    %v403 = vpack.c.b16 %v359, %v355
    %v404 = vpack.c.b16 %v360, %v356
    %v405 = vpack.c.b16 %v365, %v361
    %v406 = vpack.c.b16 %v366, %v362
    %v407 = vpack.c.b16 %v367, %v363
    %v408 = vpack.c.b16 %v368, %v364
    %v409 = vpack.c.b16 %v373, %v369
    %v410 = vpack.c.b16 %v374, %v370
    %v411 = vpack.c.b16 %v375, %v371
    %v412 = vpack.c.b16 %v376, %v372
    %v413 = vpack.c.b16 %v381, %v377
    %v414 = vpack.c.b16 %v382, %v378
    %v415 = vpack.c.b16 %v383, %v379
    %v416 = vpack.c.b16 %v384, %v380
    %449 = vmatpush.bf16.msra.mxu0 %v413
    %450 = vmatpush.bf16.msra.mxu0 %v409
    %451 = vmatpush.bf16.msra.mxu0 %v405
    %452 = vmatpush.bf16.msra.mxu0 %v401
    %453 = vmatpush.bf16.msra.mxu0 %v397
    %454 = vmatpush.bf16.msra.mxu0 %v393
    %455 = vmatpush.bf16.msra.mxu0 %v389
    %456 = vmatpush.bf16.msra.mxu0 %v385
    %457 = vmatmul.bf16.gmra.mxu0 %v256
    %v458 = vpop.f32.mrf.mxu0
    %v459 = vadd.f32 0.0, %v458
    %v460 = vpop.f32.mrf.mxu0
    %461 = vdwg.mxu0
    %462 = vmatpush.bf16.msra.mxu0 %v414
    %463 = vmatpush.bf16.msra.mxu0 %v410
    %464 = vmatpush.bf16.msra.mxu0 %v406
    %465 = vmatpush.bf16.msra.mxu0 %v402
    %466 = vmatpush.bf16.msra.mxu0 %v398
    %467 = vmatpush.bf16.msra.mxu0 %v394
    %468 = vmatpush.bf16.msra.mxu0 %v390
    %469 = vmatpush.bf16.msra.mxu0 %v386
    %470 = vmatmul.bf16.gmra.mxu0 %v256
    %v471 = vpop.f32.mrf.mxu0
    %v472 = vadd.f32 0.0, %v471
    %v473 = vpop.f32.mrf.mxu0
    %474 = vdwg.mxu0
    %475 = vmatpush.bf16.msra.mxu0 %v415
    %476 = vmatpush.bf16.msra.mxu0 %v411
    %477 = vmatpush.bf16.msra.mxu0 %v407
    %478 = vmatpush.bf16.msra.mxu0 %v403
    %479 = vmatpush.bf16.msra.mxu0 %v399
    %480 = vmatpush.bf16.msra.mxu0 %v395
    %481 = vmatpush.bf16.msra.mxu0 %v391
    %482 = vmatpush.bf16.msra.mxu0 %v387
    %483 = vmatmul.bf16.gmra.mxu0 %v256
    %v484 = vpop.f32.mrf.mxu0
    %v485 = vadd.f32 0.0, %v484
    %v486 = vpop.f32.mrf.mxu0
    %487 = vdwg.mxu0
    %488 = vmatpush.bf16.msra.mxu0 %v416
    %489 = vmatpush.bf16.msra.mxu0 %v412
    %490 = vmatpush.bf16.msra.mxu0 %v408
    %491 = vmatpush.bf16.msra.mxu0 %v404
    %492 = vmatpush.bf16.msra.mxu0 %v400
    %493 = vmatpush.bf16.msra.mxu0 %v396
    %494 = vmatpush.bf16.msra.mxu0 %v392
    %495 = vmatpush.bf16.msra.mxu0 %v388
    %496 = vmatmul.bf16.gmra.mxu0 %v256
    %v497 = vpop.f32.mrf.mxu0
    %v498 = vadd.f32 0.0, %v497
    %v499 = vpop.f32.mrf.mxu0
    %500 = vdwg.mxu0
    %v501 = vadd.f32 %v251, %v459
    %v502 = vadd.f32 %v252, %v472
    %v503 = vadd.f32 %v253, %v485
    %v504 = vadd.f32 %v254, %v498
    %v505 = vld [vmem:[%s6] sm:$0xf]
    %v507 = vperm.slane %v505, 0
    %v508 = vperm.slane %v505, 1
    %v509 = vperm.slane %v505, 2
    %v510 = vperm.slane %v505, 3
    %v515 = vadd.f32 %v501, %v507
    %v516 = vadd.f32 %v502, %v508
    %v517 = vadd.f32 %v503, %v509
    %v518 = vadd.f32 %v504, %v510
    %v519 = vld [vmem:[#allocation8] sm:$0xff]
    %v520 = vxor.u32 %v515, 2147483648
    %v521 = vmul.f32 %v520, 1.442695
    %v522 = vpow.pop %v521
    %v523 = vadd.f32 %v522, 1.0
    %v524 = vrcp.pop %v523
    %v525 = vmul.f32 %v523, %v524
    %v526 = vsub.f32 1.0, %v525
    %v527 = vmul.f32 %v524, %v526
    %v528 = vadd.f32 %v524, %v527
    %vm529 = vweird.f32 %v523
    %vm530 = vweird.f32 %v524
    %vm531 = vmor %vm529, %vm530
    %v532 = vsel %vm531, %v524, %v528
    %v533 = vand.u32 2147483647, %v523
    %vm534 = vcmp.eq.f32.partialorder %v533, 8.507059e+37
    %v535 = vand.u32 %v523, 2147483648
    %v536 = vor.u32 1.1754944e-38, %v535
    %v537 = vsel %vm534, %v536, %v532
    %v538 = vmul.f32 1.0, %v537
    %v539 = vxor.u32 %v516, 2147483648
    %v540 = vmul.f32 %v539, 1.442695
    %v541 = vpow.pop %v540
    %v542 = vadd.f32 %v541, 1.0
    %v543 = vrcp.pop %v542
    %v544 = vmul.f32 %v542, %v543
    %v545 = vsub.f32 1.0, %v544
    %v546 = vmul.f32 %v543, %v545
    %v547 = vadd.f32 %v543, %v546
    %vm548 = vweird.f32 %v542
    %vm549 = vweird.f32 %v543
    %vm550 = vmor %vm548, %vm549
    %v551 = vsel %vm550, %v543, %v547
    %v552 = vand.u32 2147483647, %v542
    %vm553 = vcmp.eq.f32.partialorder %v552, 8.507059e+37
    %v554 = vand.u32 %v542, 2147483648
    %v555 = vor.u32 1.1754944e-38, %v554
    %v556 = vsel %vm553, %v555, %v551
    %v557 = vmul.f32 1.0, %v556
    %v558 = vtanh.pop %v517
    %v559 = vxor.u32 %v518, 2147483648
    %v560 = vmul.f32 %v559, 1.442695
    %v561 = vpow.pop %v560
    %v562 = vadd.f32 %v561, 1.0
    %v563 = vrcp.pop %v562
    %v564 = vmul.f32 %v562, %v563
    %v565 = vsub.f32 1.0, %v564
    %v566 = vmul.f32 %v563, %v565
    %v567 = vadd.f32 %v563, %v566
    %vm568 = vweird.f32 %v562
    %vm569 = vweird.f32 %v563
    %vm570 = vmor %vm568, %vm569
    %v571 = vsel %vm570, %v563, %v567
    %v572 = vand.u32 2147483647, %v562
    %vm573 = vcmp.eq.f32.partialorder %v572, 8.507059e+37
    %v574 = vand.u32 %v562, 2147483648
    %v575 = vor.u32 1.1754944e-38, %v574
    %v576 = vsel %vm573, %v575, %v571
    %v577 = vmul.f32 1.0, %v576
    %v578 = vmul.f32 %v557, %v519
    %v579 = vmul.f32 %v538, %v558
    %v580 = vadd.f32 %v578, %v579
    %v581 = vtanh.pop %v580
    %v582 = vmul.f32 %v577, %v581
    %583 = vst [vmem:[#allocation17] sm:$0xff] %v582
    %584 = vst [vmem:[#allocation19] sm:$0xff] %v580
    %s585 = scalar_lea.vmem [#allocation7], 8
    %v586 = vld [vmem:[%s585] sm:$0xff]
    %v587 = vpack.c.bf16 %v582, %v582
    %v588 = vpack.c.bf16 %v586, %v586
    %v589 = vld [vmem:[#allocation13] sm:$0xff]
    %v590 = vld [vmem:[#allocation13 + $0x8] sm:$0xff]
    %v591 = vld [vmem:[#allocation13 + $0x10] sm:$0xff]
    %v592 = vld [vmem:[#allocation13 + $0x18] sm:$0xff]
    %v593 = vld [vmem:[#allocation13 + $0x20] sm:$0xff]
    %v594 = vld [vmem:[#allocation13 + $0x28] sm:$0xff]
    %v595 = vld [vmem:[#allocation13 + $0x30] sm:$0xff]
    %v596 = vld [vmem:[#allocation13 + $0x38] sm:$0xff]
    %v597 = vld [vmem:[#allocation13 + $0x40] sm:$0xff]
    %v598 = vld [vmem:[#allocation13 + $0x48] sm:$0xff]
    %v599 = vld [vmem:[#allocation13 + $0x50] sm:$0xff]
    %v600 = vld [vmem:[#allocation13 + $0x58] sm:$0xff]
    %v601 = vld [vmem:[#allocation13 + $0x60] sm:$0xff]
    %v602 = vld [vmem:[#allocation13 + $0x68] sm:$0xff]
    %v603 = vld [vmem:[#allocation13 + $0x70] sm:$0xff]
    %v604 = vld [vmem:[#allocation13 + $0x78] sm:$0xff]
    %v605 = vld [vmem:[#allocation13 + $0x80] sm:$0xff]
    %v606 = vld [vmem:[#allocation13 + $0x88] sm:$0xff]
    %v607 = vld [vmem:[#allocation13 + $0x90] sm:$0xff]
    %v608 = vld [vmem:[#allocation13 + $0x98] sm:$0xff]
    %v609 = vld [vmem:[#allocation13 + $0xa0] sm:$0xff]
    %v610 = vld [vmem:[#allocation13 + $0xa8] sm:$0xff]
    %v611 = vld [vmem:[#allocation13 + $0xb0] sm:$0xff]
    %v612 = vld [vmem:[#allocation13 + $0xb8] sm:$0xff]
    %v613 = vld [vmem:[#allocation13 + $0xc0] sm:$0xff]
    %v614 = vld [vmem:[#allocation13 + $0xc8] sm:$0xff]
    %v615 = vld [vmem:[#allocation13 + $0xd0] sm:$0xff]
    %v616 = vld [vmem:[#allocation13 + $0xd8] sm:$0xff]
    %v617 = vld [vmem:[#allocation13 + $0xe0] sm:$0xff]
    %v618 = vld [vmem:[#allocation13 + $0xe8] sm:$0xff]
    %v619 = vld [vmem:[#allocation13 + $0xf0] sm:$0xff]
    %v620 = vld [vmem:[#allocation13 + $0xf8] sm:$0xff]
    %v621 = vld [vmem:[#allocation13 + $0x100] sm:$0xff]
    %v622 = vld [vmem:[#allocation13 + $0x108] sm:$0xff]
    %v623 = vld [vmem:[#allocation13 + $0x110] sm:$0xff]
    %v624 = vld [vmem:[#allocation13 + $0x118] sm:$0xff]
    %v625 = vld [vmem:[#allocation13 + $0x120] sm:$0xff]
    %v626 = vld [vmem:[#allocation13 + $0x128] sm:$0xff]
    %v627 = vld [vmem:[#allocation13 + $0x130] sm:$0xff]
    %v628 = vld [vmem:[#allocation13 + $0x138] sm:$0xff]
    %v629 = vld [vmem:[#allocation13 + $0x140] sm:$0xff]
    %v630 = vld [vmem:[#allocation13 + $0x148] sm:$0xff]
    %v631 = vld [vmem:[#allocation13 + $0x150] sm:$0xff]
    %v632 = vld [vmem:[#allocation13 + $0x158] sm:$0xff]
    %v633 = vld [vmem:[#allocation13 + $0x160] sm:$0xff]
    %v634 = vld [vmem:[#allocation13 + $0x168] sm:$0xff]
    %v635 = vld [vmem:[#allocation13 + $0x170] sm:$0xff]
    %v636 = vld [vmem:[#allocation13 + $0x178] sm:$0xff]
    %v637 = vld [vmem:[#allocation13 + $0x180] sm:$0xff]
    %v638 = vld [vmem:[#allocation13 + $0x188] sm:$0xff]
    %v639 = vld [vmem:[#allocation13 + $0x190] sm:$0xff]
    %v640 = vld [vmem:[#allocation13 + $0x198] sm:$0xff]
    %v641 = vld [vmem:[#allocation13 + $0x1a0] sm:$0xff]
    %v642 = vld [vmem:[#allocation13 + $0x1a8] sm:$0xff]
    %v643 = vld [vmem:[#allocation13 + $0x1b0] sm:$0xff]
    %v644 = vld [vmem:[#allocation13 + $0x1b8] sm:$0xff]
    %v645 = vld [vmem:[#allocation13 + $0x1c0] sm:$0xff]
    %v646 = vld [vmem:[#allocation13 + $0x1c8] sm:$0xff]
    %v647 = vld [vmem:[#allocation13 + $0x1d0] sm:$0xff]
    %v648 = vld [vmem:[#allocation13 + $0x1d8] sm:$0xff]
    %v649 = vld [vmem:[#allocation13 + $0x1e0] sm:$0xff]
    %v650 = vld [vmem:[#allocation13 + $0x1e8] sm:$0xff]
    %v651 = vld [vmem:[#allocation13 + $0x1f0] sm:$0xff]
    %v652 = vld [vmem:[#allocation13 + $0x1f8] sm:$0xff]
    %s653 = scalar_lea.vmem %s6, 4
    %v654 = vld [vmem:[%s653] sm:$0xf]
    %v656 = vperm.slane %v654, 0
    %v657 = vperm.slane %v654, 1
    %v658 = vperm.slane %v654, 2
    %v659 = vperm.slane %v654, 3
    %v728 = vunpack.c.l.b16 %v589
    %v729 = vunpack.c.h.b16 %v589
    %v730 = vunpack.c.l.b16 %v590
    %v731 = vunpack.c.h.b16 %v590
    %v732 = vunpack.c.l.b16 %v591
    %v733 = vunpack.c.h.b16 %v591
    %v734 = vunpack.c.l.b16 %v592
    %v735 = vunpack.c.h.b16 %v592
    %v736 = vunpack.c.l.b16 %v593
    %v737 = vunpack.c.h.b16 %v593
    %v738 = vunpack.c.l.b16 %v594
    %v739 = vunpack.c.h.b16 %v594
    %v740 = vunpack.c.l.b16 %v595
    %v741 = vunpack.c.h.b16 %v595
    %v742 = vunpack.c.l.b16 %v596
    %v743 = vunpack.c.h.b16 %v596
    %v744 = vunpack.c.l.b16 %v597
    %v745 = vunpack.c.h.b16 %v597
    %v746 = vunpack.c.l.b16 %v598
    %v747 = vunpack.c.h.b16 %v598
    %v748 = vunpack.c.l.b16 %v599
    %v749 = vunpack.c.h.b16 %v599
    %v750 = vunpack.c.l.b16 %v600
    %v751 = vunpack.c.h.b16 %v600
    %v752 = vunpack.c.l.b16 %v601
    %v753 = vunpack.c.h.b16 %v601
    %v754 = vunpack.c.l.b16 %v602
    %v755 = vunpack.c.h.b16 %v602
    %v756 = vunpack.c.l.b16 %v603
    %v757 = vunpack.c.h.b16 %v603
    %v758 = vunpack.c.l.b16 %v604
    %v759 = vunpack.c.h.b16 %v604
    %v760 = vunpack.c.l.b16 %v605
    %v761 = vunpack.c.h.b16 %v605
    %v762 = vunpack.c.l.b16 %v606
    %v763 = vunpack.c.h.b16 %v606
    %v764 = vunpack.c.l.b16 %v607
    %v765 = vunpack.c.h.b16 %v607
    %v766 = vunpack.c.l.b16 %v608
    %v767 = vunpack.c.h.b16 %v608
    %v768 = vunpack.c.l.b16 %v609
    %v769 = vunpack.c.h.b16 %v609
    %v770 = vunpack.c.l.b16 %v610
    %v771 = vunpack.c.h.b16 %v610
    %v772 = vunpack.c.l.b16 %v611
    %v773 = vunpack.c.h.b16 %v611
    %v774 = vunpack.c.l.b16 %v612
    %v775 = vunpack.c.h.b16 %v612
    %v776 = vunpack.c.l.b16 %v613
    %v777 = vunpack.c.h.b16 %v613
    %v778 = vunpack.c.l.b16 %v614
    %v779 = vunpack.c.h.b16 %v614
    %v780 = vunpack.c.l.b16 %v615
    %v781 = vunpack.c.h.b16 %v615
    %v782 = vunpack.c.l.b16 %v616
    %v783 = vunpack.c.h.b16 %v616
    %v784 = vunpack.c.l.b16 %v617
    %v785 = vunpack.c.h.b16 %v617
    %v786 = vunpack.c.l.b16 %v618
    %v787 = vunpack.c.h.b16 %v618
    %v788 = vunpack.c.l.b16 %v619
    %v789 = vunpack.c.h.b16 %v619
    %v790 = vunpack.c.l.b16 %v620
    %v791 = vunpack.c.h.b16 %v620
    %v792 = vunpack.c.l.b16 %v621
    %v793 = vunpack.c.h.b16 %v621
    %v794 = vunpack.c.l.b16 %v622
    %v795 = vunpack.c.h.b16 %v622
    %v796 = vunpack.c.l.b16 %v623
    %v797 = vunpack.c.h.b16 %v623
    %v798 = vunpack.c.l.b16 %v624
    %v799 = vunpack.c.h.b16 %v624
    %v800 = vunpack.c.l.b16 %v625
    %v801 = vunpack.c.h.b16 %v625
    %v802 = vunpack.c.l.b16 %v626
    %v803 = vunpack.c.h.b16 %v626
    %v804 = vunpack.c.l.b16 %v627
    %v805 = vunpack.c.h.b16 %v627
    %v806 = vunpack.c.l.b16 %v628
    %v807 = vunpack.c.h.b16 %v628
    %v808 = vunpack.c.l.b16 %v629
    %v809 = vunpack.c.h.b16 %v629
    %v810 = vunpack.c.l.b16 %v630
    %v811 = vunpack.c.h.b16 %v630
    %v812 = vunpack.c.l.b16 %v631
    %v813 = vunpack.c.h.b16 %v631
    %v814 = vunpack.c.l.b16 %v632
    %v815 = vunpack.c.h.b16 %v632
    %v816 = vunpack.c.l.b16 %v633
    %v817 = vunpack.c.h.b16 %v633
    %v818 = vunpack.c.l.b16 %v634
    %v819 = vunpack.c.h.b16 %v634
    %v820 = vunpack.c.l.b16 %v635
    %v821 = vunpack.c.h.b16 %v635
    %v822 = vunpack.c.l.b16 %v636
    %v823 = vunpack.c.h.b16 %v636
    %v824 = vunpack.c.l.b16 %v637
    %v825 = vunpack.c.h.b16 %v637
    %v826 = vunpack.c.l.b16 %v638
    %v827 = vunpack.c.h.b16 %v638
    %v828 = vunpack.c.l.b16 %v639
    %v829 = vunpack.c.h.b16 %v639
    %v830 = vunpack.c.l.b16 %v640
    %v831 = vunpack.c.h.b16 %v640
    %v832 = vunpack.c.l.b16 %v641
    %v833 = vunpack.c.h.b16 %v641
    %v834 = vunpack.c.l.b16 %v642
    %v835 = vunpack.c.h.b16 %v642
    %v836 = vunpack.c.l.b16 %v643
    %v837 = vunpack.c.h.b16 %v643
    %v838 = vunpack.c.l.b16 %v644
    %v839 = vunpack.c.h.b16 %v644
    %v840 = vunpack.c.l.b16 %v645
    %v841 = vunpack.c.h.b16 %v645
    %v842 = vunpack.c.l.b16 %v646
    %v843 = vunpack.c.h.b16 %v646
    %v844 = vunpack.c.l.b16 %v647
    %v845 = vunpack.c.h.b16 %v647
    %v846 = vunpack.c.l.b16 %v648
    %v847 = vunpack.c.h.b16 %v648
    %v848 = vunpack.c.l.b16 %v649
    %v849 = vunpack.c.h.b16 %v649
    %v850 = vunpack.c.l.b16 %v650
    %v851 = vunpack.c.h.b16 %v650
    %v852 = vunpack.c.l.b16 %v651
    %v853 = vunpack.c.h.b16 %v651
    %v854 = vunpack.c.l.b16 %v652
    %v855 = vunpack.c.h.b16 %v652
    %v856 = vpack.c.b16 %v732, %v728
    %v857 = vpack.c.b16 %v733, %v729
    %v858 = vpack.c.b16 %v734, %v730
    %v859 = vpack.c.b16 %v735, %v731
    %v860 = vpack.c.b16 %v740, %v736
    %v861 = vpack.c.b16 %v741, %v737
    %v862 = vpack.c.b16 %v742, %v738
    %v863 = vpack.c.b16 %v743, %v739
    %v864 = vpack.c.b16 %v748, %v744
    %v865 = vpack.c.b16 %v749, %v745
    %v866 = vpack.c.b16 %v750, %v746
    %v867 = vpack.c.b16 %v751, %v747
    %v868 = vpack.c.b16 %v756, %v752
    %v869 = vpack.c.b16 %v757, %v753
    %v870 = vpack.c.b16 %v758, %v754
    %v871 = vpack.c.b16 %v759, %v755
    %v872 = vpack.c.b16 %v764, %v760
    %v873 = vpack.c.b16 %v765, %v761
    %v874 = vpack.c.b16 %v766, %v762
    %v875 = vpack.c.b16 %v767, %v763
    %v876 = vpack.c.b16 %v772, %v768
    %v877 = vpack.c.b16 %v773, %v769
    %v878 = vpack.c.b16 %v774, %v770
    %v879 = vpack.c.b16 %v775, %v771
    %v880 = vpack.c.b16 %v780, %v776
    %v881 = vpack.c.b16 %v781, %v777
    %v882 = vpack.c.b16 %v782, %v778
    %v883 = vpack.c.b16 %v783, %v779
    %v884 = vpack.c.b16 %v788, %v784
    %v885 = vpack.c.b16 %v789, %v785
    %v886 = vpack.c.b16 %v790, %v786
    %v887 = vpack.c.b16 %v791, %v787
    %v888 = vpack.c.b16 %v796, %v792
    %v889 = vpack.c.b16 %v797, %v793
    %v890 = vpack.c.b16 %v798, %v794
    %v891 = vpack.c.b16 %v799, %v795
    %v892 = vpack.c.b16 %v804, %v800
    %v893 = vpack.c.b16 %v805, %v801
    %v894 = vpack.c.b16 %v806, %v802
    %v895 = vpack.c.b16 %v807, %v803
    %v896 = vpack.c.b16 %v812, %v808
    %v897 = vpack.c.b16 %v813, %v809
    %v898 = vpack.c.b16 %v814, %v810
    %v899 = vpack.c.b16 %v815, %v811
    %v900 = vpack.c.b16 %v820, %v816
    %v901 = vpack.c.b16 %v821, %v817
    %v902 = vpack.c.b16 %v822, %v818
    %v903 = vpack.c.b16 %v823, %v819
    %v904 = vpack.c.b16 %v828, %v824
    %v905 = vpack.c.b16 %v829, %v825
    %v906 = vpack.c.b16 %v830, %v826
    %v907 = vpack.c.b16 %v831, %v827
    %v908 = vpack.c.b16 %v836, %v832
    %v909 = vpack.c.b16 %v837, %v833
    %v910 = vpack.c.b16 %v838, %v834
    %v911 = vpack.c.b16 %v839, %v835
    %v912 = vpack.c.b16 %v844, %v840
    %v913 = vpack.c.b16 %v845, %v841
    %v914 = vpack.c.b16 %v846, %v842
    %v915 = vpack.c.b16 %v847, %v843
    %v916 = vpack.c.b16 %v852, %v848
    %v917 = vpack.c.b16 %v853, %v849
    %v918 = vpack.c.b16 %v854, %v850
    %v919 = vpack.c.b16 %v855, %v851
    %984 = vmatpush.bf16.msra.mxu0 %v884
    %985 = vmatpush.bf16.msra.mxu0 %v880
    %986 = vmatpush.bf16.msra.mxu0 %v876
    %987 = vmatpush.bf16.msra.mxu0 %v872
    %988 = vmatpush.bf16.msra.mxu0 %v868
    %989 = vmatpush.bf16.msra.mxu0 %v864
    %990 = vmatpush.bf16.msra.mxu0 %v860
    %991 = vmatpush.bf16.msra.mxu0 %v856
    %992 = vmatmul.bf16.gmra.mxu0 %v587
    %v993 = vpop.f32.mrf.mxu0
    %v994 = vadd.f32 %v656, %v993
    %v995 = vpop.f32.mrf.mxu0
    %996 = vdwg.mxu0
    %997 = vmatpush.bf16.msra.mxu0 %v916
    %998 = vmatpush.bf16.msra.mxu0 %v912
    %999 = vmatpush.bf16.msra.mxu0 %v908
    %1000 = vmatpush.bf16.msra.mxu0 %v904
    %1001 = vmatpush.bf16.msra.mxu0 %v900
    %1002 = vmatpush.bf16.msra.mxu0 %v896
    %1003 = vmatpush.bf16.msra.mxu0 %v892
    %1004 = vmatpush.bf16.msra.mxu0 %v888
    %1005 = vmatmul.bf16.gmra.mxu0 %v588
    %v1006 = vpop.f32.mrf.mxu0
    %v1007 = vadd.f32 %v994, %v1006
    %v1008 = vpop.f32.mrf.mxu0
    %1009 = vdwg.mxu0
    %1010 = vmatpush.bf16.msra.mxu0 %v885
    %1011 = vmatpush.bf16.msra.mxu0 %v881
    %1012 = vmatpush.bf16.msra.mxu0 %v877
    %1013 = vmatpush.bf16.msra.mxu0 %v873
    %1014 = vmatpush.bf16.msra.mxu0 %v869
    %1015 = vmatpush.bf16.msra.mxu0 %v865
    %1016 = vmatpush.bf16.msra.mxu0 %v861
    %1017 = vmatpush.bf16.msra.mxu0 %v857
    %1018 = vmatmul.bf16.gmra.mxu0 %v587
    %v1019 = vpop.f32.mrf.mxu0
    %v1020 = vadd.f32 %v657, %v1019
    %v1021 = vpop.f32.mrf.mxu0
    %1022 = vdwg.mxu0
    %1023 = vmatpush.bf16.msra.mxu0 %v917
    %1024 = vmatpush.bf16.msra.mxu0 %v913
    %1025 = vmatpush.bf16.msra.mxu0 %v909
    %1026 = vmatpush.bf16.msra.mxu0 %v905
    %1027 = vmatpush.bf16.msra.mxu0 %v901
    %1028 = vmatpush.bf16.msra.mxu0 %v897
    %1029 = vmatpush.bf16.msra.mxu0 %v893
    %1030 = vmatpush.bf16.msra.mxu0 %v889
    %1031 = vmatmul.bf16.gmra.mxu0 %v588
    %v1032 = vpop.f32.mrf.mxu0
    %v1033 = vadd.f32 %v1020, %v1032
    %v1034 = vpop.f32.mrf.mxu0
    %1035 = vdwg.mxu0
    %1036 = vmatpush.bf16.msra.mxu0 %v886
    %1037 = vmatpush.bf16.msra.mxu0 %v882
    %1038 = vmatpush.bf16.msra.mxu0 %v878
    %1039 = vmatpush.bf16.msra.mxu0 %v874
    %1040 = vmatpush.bf16.msra.mxu0 %v870
    %1041 = vmatpush.bf16.msra.mxu0 %v866
    %1042 = vmatpush.bf16.msra.mxu0 %v862
    %1043 = vmatpush.bf16.msra.mxu0 %v858
    %1044 = vmatmul.bf16.gmra.mxu0 %v587
    %v1045 = vpop.f32.mrf.mxu0
    %v1046 = vadd.f32 %v658, %v1045
    %v1047 = vpop.f32.mrf.mxu0
    %1048 = vdwg.mxu0
    %1049 = vmatpush.bf16.msra.mxu0 %v918
    %1050 = vmatpush.bf16.msra.mxu0 %v914
    %1051 = vmatpush.bf16.msra.mxu0 %v910
    %1052 = vmatpush.bf16.msra.mxu0 %v906
    %1053 = vmatpush.bf16.msra.mxu0 %v902
    %1054 = vmatpush.bf16.msra.mxu0 %v898
    %1055 = vmatpush.bf16.msra.mxu0 %v894
    %1056 = vmatpush.bf16.msra.mxu0 %v890
    %1057 = vmatmul.bf16.gmra.mxu0 %v588
    %v1058 = vpop.f32.mrf.mxu0
    %v1059 = vadd.f32 %v1046, %v1058
    %v1060 = vpop.f32.mrf.mxu0
    %1061 = vdwg.mxu0
    %1062 = vmatpush.bf16.msra.mxu0 %v887
    %1063 = vmatpush.bf16.msra.mxu0 %v883
    %1064 = vmatpush.bf16.msra.mxu0 %v879
    %1065 = vmatpush.bf16.msra.mxu0 %v875
    %1066 = vmatpush.bf16.msra.mxu0 %v871
    %1067 = vmatpush.bf16.msra.mxu0 %v867
    %1068 = vmatpush.bf16.msra.mxu0 %v863
    %1069 = vmatpush.bf16.msra.mxu0 %v859
    %1070 = vmatmul.bf16.gmra.mxu0 %v587
    %v1071 = vpop.f32.mrf.mxu0
    %v1072 = vadd.f32 %v659, %v1071
    %v1073 = vpop.f32.mrf.mxu0
    %1074 = vdwg.mxu0
    %1075 = vmatpush.bf16.msra.mxu0 %v919
    %1076 = vmatpush.bf16.msra.mxu0 %v915
    %1077 = vmatpush.bf16.msra.mxu0 %v911
    %1078 = vmatpush.bf16.msra.mxu0 %v907
    %1079 = vmatpush.bf16.msra.mxu0 %v903
    %1080 = vmatpush.bf16.msra.mxu0 %v899
    %1081 = vmatpush.bf16.msra.mxu0 %v895
    %1082 = vmatpush.bf16.msra.mxu0 %v891
    %1083 = vmatmul.bf16.gmra.mxu0 %v588
    %v1084 = vpop.f32.mrf.mxu0
    %v1085 = vadd.f32 %v1072, %v1084
    %v1086 = vpop.f32.mrf.mxu0
    %1087 = vdwg.mxu0
    %s1088 = scalar_lea.vmem [#allocation8], 8
    %v1089 = vld [vmem:[%s1088] sm:$0xff]
    %v1090 = vxor.u32 %v1007, 2147483648
    %v1091 = vmul.f32 %v1090, 1.442695
    %v1092 = vpow.pop %v1091
    %v1093 = vadd.f32 %v1092, 1.0
    %v1094 = vrcp.pop %v1093
    %v1095 = vmul.f32 %v1093, %v1094
    %v1096 = vsub.f32 1.0, %v1095
    %v1097 = vmul.f32 %v1094, %v1096
    %v1098 = vadd.f32 %v1094, %v1097
    %vm1099 = vweird.f32 %v1093
    %vm1100 = vweird.f32 %v1094
    %vm1101 = vmor %vm1099, %vm1100
    %v1102 = vsel %vm1101, %v1094, %v1098
    %v1103 = vand.u32 2147483647, %v1093
    %vm1104 = vcmp.eq.f32.partialorder %v1103, 8.507059e+37
    %v1105 = vand.u32 %v1093, 2147483648
    %v1106 = vor.u32 1.1754944e-38, %v1105
    %v1107 = vsel %vm1104, %v1106, %v1102
    %v1108 = vmul.f32 1.0, %v1107
    %v1109 = vxor.u32 %v1033, 2147483648
    %v1110 = vmul.f32 %v1109, 1.442695
    %v1111 = vpow.pop %v1110
    %v1112 = vadd.f32 %v1111, 1.0
    %v1113 = vrcp.pop %v1112
    %v1114 = vmul.f32 %v1112, %v1113
    %v1115 = vsub.f32 1.0, %v1114
    %v1116 = vmul.f32 %v1113, %v1115
    %v1117 = vadd.f32 %v1113, %v1116
    %vm1118 = vweird.f32 %v1112
    %vm1119 = vweird.f32 %v1113
    %vm1120 = vmor %vm1118, %vm1119
    %v1121 = vsel %vm1120, %v1113, %v1117
    %v1122 = vand.u32 2147483647, %v1112
    %vm1123 = vcmp.eq.f32.partialorder %v1122, 8.507059e+37
    %v1124 = vand.u32 %v1112, 2147483648
    %v1125 = vor.u32 1.1754944e-38, %v1124
    %v1126 = vsel %vm1123, %v1125, %v1121
    %v1127 = vmul.f32 1.0, %v1126
    %v1128 = vtanh.pop %v1059
    %v1129 = vxor.u32 %v1085, 2147483648
    %v1130 = vmul.f32 %v1129, 1.442695
    %v1131 = vpow.pop %v1130
    %v1132 = vadd.f32 %v1131, 1.0
    %v1133 = vrcp.pop %v1132
    %v1134 = vmul.f32 %v1132, %v1133
    %v1135 = vsub.f32 1.0, %v1134
    %v1136 = vmul.f32 %v1133, %v1135
    %v1137 = vadd.f32 %v1133, %v1136
    %vm1138 = vweird.f32 %v1132
    %vm1139 = vweird.f32 %v1133
    %vm1140 = vmor %vm1138, %vm1139
    %v1141 = vsel %vm1140, %v1133, %v1137
    %v1142 = vand.u32 2147483647, %v1132
    %vm1143 = vcmp.eq.f32.partialorder %v1142, 8.507059e+37
    %v1144 = vand.u32 %v1132, 2147483648
    %v1145 = vor.u32 1.1754944e-38, %v1144
    %v1146 = vsel %vm1143, %v1145, %v1141
    %v1147 = vmul.f32 1.0, %v1146
    %v1148 = vmul.f32 %v1127, %v1089
    %v1149 = vmul.f32 %v1108, %v1128
    %v1150 = vadd.f32 %v1148, %v1149
    %v1151 = vtanh.pop %v1150
    %v1152 = vmul.f32 %v1147, %v1151
    %s1153 = scalar_lea.vmem [#allocation17], 8
    %1154 = vst [vmem:[%s1153] sm:$0xff] %v1152
    %s1155 = scalar_lea.vmem [#allocation19], 8
    %1156 = vst [vmem:[%s1155] sm:$0xff] %v1150
    %v1157 = vpack.c.bf16 %v1152, %v1152
    %v1158 = vld [vmem:[#allocation14] sm:$0xf]
    %v1159 = vld [vmem:[#allocation14 + $0x4] sm:$0xf]
    %v1160 = vld [vmem:[#allocation14 + $0x8] sm:$0xf]
    %v1161 = vld [vmem:[#allocation14 + $0xc] sm:$0xf]
    %v1162 = vld [vmem:[#allocation14 + $0x10] sm:$0xf]
    %v1163 = vld [vmem:[#allocation14 + $0x14] sm:$0xf]
    %v1164 = vld [vmem:[#allocation14 + $0x18] sm:$0xf]
    %v1165 = vld [vmem:[#allocation14 + $0x1c] sm:$0xf]
    %v1166 = vld [vmem:[#allocation14 + $0x20] sm:$0xf]
    %v1167 = vld [vmem:[#allocation14 + $0x24] sm:$0xf]
    %v1168 = vld [vmem:[#allocation14 + $0x28] sm:$0xf]
    %v1169 = vld [vmem:[#allocation14 + $0x2c] sm:$0xf]
    %v1170 = vld [vmem:[#allocation14 + $0x30] sm:$0xf]
    %v1171 = vld [vmem:[#allocation14 + $0x34] sm:$0xf]
    %v1172 = vld [vmem:[#allocation14 + $0x38] sm:$0xf]
    %v1173 = vld [vmem:[#allocation14 + $0x3c] sm:$0xf]
    %v1174 = vld [vmem:[%s8] sm:$0x1]
    %v1176 = vperm.slane %v1174, 0
    %v1194 = vunpack.c.l.b16 %v1158
    %v1195 = vunpack.c.l.b16 %v1159
    %v1196 = vunpack.c.l.b16 %v1160
    %v1197 = vunpack.c.l.b16 %v1161
    %v1198 = vunpack.c.l.b16 %v1162
    %v1199 = vunpack.c.l.b16 %v1163
    %v1200 = vunpack.c.l.b16 %v1164
    %v1201 = vunpack.c.l.b16 %v1165
    %v1202 = vunpack.c.l.b16 %v1166
    %v1203 = vunpack.c.l.b16 %v1167
    %v1204 = vunpack.c.l.b16 %v1168
    %v1205 = vunpack.c.l.b16 %v1169
    %v1206 = vunpack.c.l.b16 %v1170
    %v1207 = vunpack.c.l.b16 %v1171
    %v1208 = vunpack.c.l.b16 %v1172
    %v1209 = vunpack.c.l.b16 %v1173
    %v1210 = vpack.c.b16 %v1195, %v1194
    %v1211 = vpack.c.b16 %v1197, %v1196
    %v1212 = vpack.c.b16 %v1199, %v1198
    %v1213 = vpack.c.b16 %v1201, %v1200
    %v1214 = vpack.c.b16 %v1203, %v1202
    %v1215 = vpack.c.b16 %v1205, %v1204
    %v1216 = vpack.c.b16 %v1207, %v1206
    %v1217 = vpack.c.b16 %v1209, %v1208
    %1226 = vmatpush.bf16.msra.mxu0 %v1217
    %1227 = vmatpush.bf16.msra.mxu0 %v1216
    %1228 = vmatpush.bf16.msra.mxu0 %v1215
    %1229 = vmatpush.bf16.msra.mxu0 %v1214
    %1230 = vmatpush.bf16.msra.mxu0 %v1213
    %1231 = vmatpush.bf16.msra.mxu0 %v1212
    %1232 = vmatpush.bf16.msra.mxu0 %v1211
    %1233 = vmatpush.bf16.msra.mxu0 %v1210
    %1234 = vmatmul.bf16.gmra.mxu0 %v1157
    %v1235 = vpop.f32.mrf.mxu0
    %v1236 = vadd.f32 %v1176, %v1235
    %v1237 = vpop.f32.mrf.mxu0
    %1238 = vdwg.mxu0
    %1239 = vst [vmem:[#allocation16] sm:$0xff] %v1236
    // Predicated region
    $region66: #{rnn_forward.1} parent=1 // pred_check
      _
    $region67: #{rnn_forward.1} parent=1 // pred_check_branch
      %1241 = sbr.rel (0) target = $region69
    $region68: #{rnn_forward.1} parent=1 // pred_region
      %1243 = vsyncadd [#allocation5], 0
      %s1245 = sshll.u32 [#allocation16], 4
      %s1246 = int_to_ptr.vmem [resolvable:$true] %s1245
      %s1247 = sshll.u32 %s9, 4
      %s1248 = int_to_ptr.hbm [resolvable:$true] %s1247
      %1250 = dma.vmem_to_hbm [thread:$0]  %s1246, 128, %s1248, [#allocation5]
    $region69: #{rnn_forward.1} parent=1 // pred_fallthru
      _
    // Predicated region
    $region70: #{rnn_forward.1} parent=1 // pred_check
      _
    $region71: #{rnn_forward.1} parent=1 // pred_check_branch
      %1252 = sbr.rel (0) target = $region73
    $region72: #{rnn_forward.1} parent=1 // pred_region
      %1254 = vsyncadd [#allocation18], 0
      %s1255 = sshll.u32 [#allocation17], 4
      %s1256 = int_to_ptr.vmem [resolvable:$true] %s1255
      %s1257 = sshll.u32 %s10, 4
      %s1258 = int_to_ptr.hbm [resolvable:$true] %s1257
      %1263 = dma.vmem_to_hbm [thread:$0]  %s1256, 256, %s1258, [#allocation18], 128, 128, 8
    $region73: #{rnn_forward.1} parent=1 // pred_fallthru
      _
    // Predicated region
    $region74: #{rnn_forward.1} parent=1 // pred_check
      _
    $region75: #{rnn_forward.1} parent=1 // pred_check_branch
      %1265 = sbr.rel (0) target = $region77
    $region76: #{rnn_forward.1} parent=1 // pred_region
      %1267 = vsyncadd [#allocation18], 0
      %s1268 = sshll.u32 [#allocation19], 4
      %s1269 = int_to_ptr.vmem [resolvable:$true] %s1268
      %s1270 = sshll.u32 %s11, 4
      %s1271 = int_to_ptr.hbm [resolvable:$true] %s1270
      %1276 = dma.vmem_to_hbm [thread:$0]  %s1269, 256, %s1271, [#allocation18], 128, 128, 8
    $region77: #{rnn_forward.1} parent=1 // pred_fallthru
      _
    // Predicated region
    $region78: #{rnn_forward.1} parent=1 // pred_check
      _
    $region79: #{rnn_forward.1} parent=1 // pred_check_branch
      %1278 = sbr.rel (0) target = $region81
    $region80: #{rnn_forward.1} parent=1 // pred_region
      %1280 = dma.done [#allocation5], 128
    $region81: #{rnn_forward.1} parent=1 // pred_fallthru
      _
    // Predicated region
    $region82: #{rnn_forward.1} parent=1 // pred_check
      _
    $region83: #{rnn_forward.1} parent=1 // pred_check_branch
      %1282 = sbr.rel (0) target = $region85
    $region84: #{rnn_forward.1} parent=1 // pred_region
      %1284 = dma.done [#allocation18], 256
    $region85: #{rnn_forward.1} parent=1 // pred_fallthru
      _
    // Predicated region
    $region86: #{rnn_forward.1} parent=1 // pred_check
      _
    $region87: #{rnn_forward.1} parent=1 // pred_check_branch
      %1286 = sbr.rel (0) target = $region89
    $region88: #{rnn_forward.1} parent=1 // pred_region
      %1288 = dma.done [#allocation18], 256
    $region89: #{rnn_forward.1} parent=1 // pred_fallthru
      _
    %1289 = vsyncpa [#allocation4], 1
    %1290 = vsyncpa [#allocation9], 1
    %1291 = vsyncpa [#allocation12], 1
    %1292 = vsyncpa [#allocation15], 1
    %1293 = vsyncpa [#allocation5], 1
    %1294 = vsyncpa [#allocation18], 1
    %1295 = vsyncpa [#allocation6], 1

</llo_original>
